<compile_context>
chip_gen: v5e
topology: v5e:2x2
jax: 0.10.0
libtpu: 0.0.40
codegen_flags: <defaults>
</compile_context>

<pallas_src>
import functools

import jax
import jax.numpy as jnp
from jax.experimental import pallas as pl
from jax.experimental.pallas import tpu as pltpu

BN_EPS = 0.8          # nn.BatchNorm1d(output_dim, 0.8) -> eps = 0.8
LRELU_SLOPE = 0.2     # nn.LeakyReLU(0.2)
NUM_BLOCKS = 6        # six gen_blocks, then Linear + Tanh
LANE = 128            # TPU lane width
SUBLANE = 8           # TPU sublane width


def _round_up(n, m):
    return (n + m - 1) // m * m


def _vanilla_gan_kernel(*refs, num_blocks, inv_n, use_mask):
    """One grid step = full generator forward on one independent minibatch."""
    x_ref = refs[0]
    idx = 1
    mask = None
    if use_mask:
        mask = refs[1][...]              # (B_pad, 1) f32, 1.0 for real rows
        idx = 2
    out_ref = refs[-1]
    params = refs[idx:-1]

    h = x_ref[...]                       # (B_pad, D_pad) bf16
    for i in range(num_blocks):
        w = params[3 * i][...]           # (din_pad, dout_pad) bf16
        gamma = params[3 * i + 1][...]   # (1, dout_pad) f32
        beta = params[3 * i + 2][...]    # (1, dout_pad) f32

        # Linear(bias=False) on the MXU, f32 accumulation.
        z = jnp.dot(h, w, preferred_element_type=jnp.float32)

        # BatchNorm1d training statistics (biased var) over the *real* rows.
        if mask is not None:
            zm = z * mask
            s1 = jnp.sum(zm, axis=0, keepdims=True)
            s2 = jnp.sum(zm * z, axis=0, keepdims=True)
        else:
            s1 = jnp.sum(z, axis=0, keepdims=True)
            s2 = jnp.sum(z * z, axis=0, keepdims=True)
        mean = s1 * inv_n
        var = jnp.maximum(s2 * inv_n - mean * mean, 0.0)

        # Fold BN into per-feature scale/shift (2 VPU ops/elem instead of 4).
        scale = gamma * jax.lax.rsqrt(var + BN_EPS)
        shift = beta - mean * scale
        zhat = z * scale + shift

        # LeakyReLU(0.2), then bf16 for the next MXU matmul.
        h = jnp.where(zhat > 0, zhat, LRELU_SLOPE * zhat).astype(jnp.bfloat16)

    w_out = params[3 * num_blocks][...]       # bf16
    b_out = params[3 * num_blocks + 1][...]   # f32
    y = jnp.dot(h, w_out, preferred_element_type=jnp.float32) + b_out
    out_ref[...] = jnp.tanh(y)


def make_params(key, latent_dim, hidden_dim, output_dim):
    """Deterministic synthetic parameters matching VanillaGAN's shapes.

    Weights are stored transposed vs. PyTorch: (in_features, out_features).
    """
    dims = [
        (latent_dim, hidden_dim),
        (hidden_dim, hidden_dim * 2),
        (hidden_dim * 2, hidden_dim * 2),
        (hidden_dim * 2, hidden_dim),
        (hidden_dim, hidden_dim),
        (hidden_dim, hidden_dim // 2),
    ]
    params = []
    for (din, dout) in dims:
        key, kw, kg, kb = jax.random.split(key, 4)
        w = jax.random.normal(kw, (din, dout), jnp.float32) * (1.0 / jnp.sqrt(din))
        gamma = 1.0 + 0.1 * jax.random.normal(kg, (1, dout), jnp.float32)
        beta = 0.1 * jax.random.normal(kb, (1, dout), jnp.float32)
        params += [w, gamma, beta]
    key, kw, kb = jax.random.split(key, 3)
    din = hidden_dim // 2
    w_out = jax.random.normal(kw, (din, output_dim), jnp.float32) * (1.0 / jnp.sqrt(din))
    b_out = 0.1 * jax.random.normal(kb, (1, output_dim), jnp.float32)
    params += [w_out, b_out]
    return params


def _pad_params(params):
    """Zero-pad feature dims to multiples of 128; cast weights to bf16."""
    padded = []
    for i in range(NUM_BLOCKS):
        w = params[3 * i]
        g = params[3 * i + 1].reshape(1, -1)
        b = params[3 * i + 2].reshape(1, -1)
        din, dout = w.shape
        din_p, dout_p = _round_up(din, LANE), _round_up(dout, LANE)
        wp = jnp.zeros((din_p, dout_p), jnp.float32).at[:din, :dout].set(w)
        gp = jnp.zeros((1, dout_p), jnp.float32).at[:, :dout].set(g)
        bp = jnp.zeros((1, dout_p), jnp.float32).at[:, :dout].set(b)
        padded += [wp.astype(jnp.bfloat16), gp, bp]
    w_out = params[-2]
    b_out = params[-1].reshape(1, -1)
    din, dout = w_out.shape
    din_p, dout_p = _round_up(din, LANE), _round_up(dout, LANE)
    wp = jnp.zeros((din_p, dout_p), jnp.float32).at[:din, :dout].set(w_out)
    bp = jnp.zeros((1, dout_p), jnp.float32).at[:, :dout].set(b_out)
    padded += [wp.astype(jnp.bfloat16), bp]
    return padded


def vanilla_gan_forward(x, params):
    """x: (batch, latent) or (num_minibatches, batch, latent) -> f32 images.

    Each minibatch along the leading axis is an independent forward pass with
    its own BatchNorm statistics (identical to calling the module per batch).
    """
    squeeze = x.ndim == 2
    if squeeze:
        x = x[None]
    assert x.ndim == 3, x.shape
    n_mb, batch, latent = x.shape
    output_dim = params[-1].reshape(1, -1).shape[-1]

    padded = _pad_params(params)
    latent_p = padded[0].shape[0]
    out_p = padded[-1].shape[-1]
    b_pad = _round_up(batch, SUBLANE)
    use_mask = b_pad != batch

    # Pad + cast the latent input (padded rows/cols are zero).
    x_p = jnp.zeros((n_mb, b_pad, latent_p), jnp.float32)
    x_p = x_p.at[:, :batch, :latent].set(x.astype(jnp.float32)).astype(jnp.bfloat16)

    inputs = [x_p]
    in_specs = [pl.BlockSpec((None, b_pad, latent_p), lambda i: (i, 0, 0))]
    if use_mask:
        mask = (jnp.arange(b_pad) < batch).astype(jnp.float32).reshape(b_pad, 1)
        inputs.append(mask)
        in_specs.append(pl.BlockSpec((b_pad, 1), lambda i: (0, 0)))
    for p in padded:
        inputs.append(p)
        in_specs.append(pl.BlockSpec(p.shape, lambda i: (0, 0)))  # VMEM-resident

    out_specs = pl.BlockSpec((None, b_pad, out_p), lambda i: (i, 0, 0))
    out_shape = jax.ShapeDtypeStruct((n_mb, b_pad, out_p), jnp.float32)

    # ---- cost estimate + VMEM budget -------------------------------------
    w_shapes = [padded[3 * i].shape for i in range(NUM_BLOCKS)] + [padded[-2].shape]
    flops = int(n_mb * sum(2 * b_pad * din * dout for din, dout in w_shapes))
    transcendentals = int(
        n_mb * (sum(dout for _, dout in w_shapes[:-1]) + b_pad * out_p))
    bytes_accessed = int(
        x_p.size * x_p.dtype.itemsize
        + n_mb * b_pad * out_p * 4
        + sum(int(p.size) * p.dtype.itemsize for p in padded))

    param_bytes = sum(int(p.size) * p.dtype.itemsize for p in padded)
    io_block_bytes = b_pad * latent_p * 2 + b_pad * out_p * 4
    max_feat = max(dout for _, dout in w_shapes)
    act_bytes = b_pad * max_feat * 4 * 8           # generous scratch headroom
    vmem_needed = param_bytes + 2 * io_block_bytes + act_bytes + (2 << 20)
    # >= 32 MiB (v5e default scoped is only 16 MiB), capped for v7x's 64 MiB.
    vmem_limit = int(min(max(2 * vmem_needed, 32 << 20), 48 << 20))

    kernel = functools.partial(
        _vanilla_gan_kernel,
        num_blocks=NUM_BLOCKS,
        inv_n=float(1.0 / batch),
        use_mask=use_mask,
    )

    out_padded = pl.pallas_call(
        kernel,
        grid=(n_mb,),
        in_specs=in_specs,
        out_specs=out_specs,
        out_shape=out_shape,
        compiler_params=pltpu.CompilerParams(
            dimension_semantics=("parallel",),
            vmem_limit_bytes=vmem_limit,
        ),
        cost_estimate=pl.CostEstimate(
            flops=flops,
            transcendentals=transcendentals,
            bytes_accessed=bytes_accessed,
        ),
    )(*inputs)

    out = out_padded[:, :batch, :output_dim]
    if squeeze:
        out = out[0]
    return out


def vanilla_gan_reference(x, params):
    """Pure-JAX f32 reference (PyTorch training-mode BN, eps=0.8)."""
    h = x.astype(jnp.float32)
    for i in range(NUM_BLOCKS):
        w = params[3 * i]
        g = params[3 * i + 1].reshape(1, -1)
        b = params[3 * i + 2].reshape(1, -1)
        z = h @ w
        mean = jnp.mean(z, axis=0, keepdims=True)
        var = jnp.mean(jnp.square(z - mean), axis=0, keepdims=True)
        zhat = (z - mean) / jnp.sqrt(var + BN_EPS) * g + b
        h = jnp.where(zhat > 0, zhat, LRELU_SLOPE * zhat)
    y = h @ params[-2] + params[-1].reshape(1, -1)
    return jnp.tanh(y)


if __name__ == "__main__":
    # Small shapes consistent with the module:
    #   resolution=8, channels=3 -> output_dim = 192
    #   latent_dim=16, hidden_dim=32, 2 independent minibatches of 8 samples
    resolution, channels = 8, 3
    latent_dim, hidden_dim = 16, 32
    num_minibatches, batch = 2, 8
    output_dim = resolution * resolution * channels

    key = jax.random.PRNGKey(0)
    key, kx = jax.random.split(key)
    x = jax.random.normal(kx, (num_minibatches, batch, latent_dim), jnp.float32)
    params = make_params(key, latent_dim, hidden_dim, output_dim)

    out = jax.block_until_ready(vanilla_gan_forward(x, params))
    assert out.shape == (num_minibatches, batch, output_dim), out.shape
    assert bool(jnp.all(jnp.isfinite(out)))

    # Compare against f32 reference (bf16 matmuls introduce small error).
    ref = jnp.stack([vanilla_gan_reference(x[i], params)
                     for i in range(num_minibatches)])
    err = float(jnp.max(jnp.abs(out - ref)))
    assert err < 0.1, f"mismatch vs f32 reference: {err}"

    # Also exercise the masked-BN path (batch not a multiple of 8).
    key, kx2 = jax.random.split(key)
    x2 = jax.random.normal(kx2, (5, latent_dim), jnp.float32)
    out2 = jax.block_until_ready(vanilla_gan_forward(x2, params))
    assert out2.shape == (5, output_dim), out2.shape
    err2 = float(jnp.max(jnp.abs(out2 - vanilla_gan_reference(x2, params))))
    assert err2 < 0.1, f"mismatch vs f32 reference (masked path): {err2}"

    print("KERNEL_OK")
</pallas_src>

<mosaic_0001>
module attributes {stable_mosaic.version = 11 : i64} {
  func.func @_vanilla_gan_kernel(%arg0: i32, %arg1: memref<1x8x128xbf16, #tpu.memory_space<vmem>>, %arg2: memref<128x128xbf16, #tpu.memory_space<vmem>>, %arg3: memref<1x128xf32, #tpu.memory_space<vmem>>, %arg4: memref<1x128xf32, #tpu.memory_space<vmem>>, %arg5: memref<128x128xbf16, #tpu.memory_space<vmem>>, %arg6: memref<1x128xf32, #tpu.memory_space<vmem>>, %arg7: memref<1x128xf32, #tpu.memory_space<vmem>>, %arg8: memref<128x128xbf16, #tpu.memory_space<vmem>>, %arg9: memref<1x128xf32, #tpu.memory_space<vmem>>, %arg10: memref<1x128xf32, #tpu.memory_space<vmem>>, %arg11: memref<128x128xbf16, #tpu.memory_space<vmem>>, %arg12: memref<1x128xf32, #tpu.memory_space<vmem>>, %arg13: memref<1x128xf32, #tpu.memory_space<vmem>>, %arg14: memref<128x128xbf16, #tpu.memory_space<vmem>>, %arg15: memref<1x128xf32, #tpu.memory_space<vmem>>, %arg16: memref<1x128xf32, #tpu.memory_space<vmem>>, %arg17: memref<128x128xbf16, #tpu.memory_space<vmem>>, %arg18: memref<1x128xf32, #tpu.memory_space<vmem>>, %arg19: memref<1x128xf32, #tpu.memory_space<vmem>>, %arg20: memref<128x256xbf16, #tpu.memory_space<vmem>>, %arg21: memref<1x256xf32, #tpu.memory_space<vmem>>, %arg22: memref<1x8x256xf32, #tpu.memory_space<vmem>>) attributes {dimension_semantics = [#tpu.dimension_semantics<parallel>], iteration_bounds = array<i64: 2>, scalar_prefetch = 0 : i64, scratch_operands = 0 : i64, tpu.core_type = #tpu.core_type<tc>, window_params = [{transform_indices = @transform_0, window_bounds = array<i64: 1, 8, 128>}, {pipeline_mode = #tpu.pipeline_mode<synchronous>, transform_indices = @transform_1, window_bounds = array<i64: 128, 128>}, {pipeline_mode = #tpu.pipeline_mode<synchronous>, transform_indices = @transform_2, window_bounds = array<i64: 1, 128>}, {pipeline_mode = #tpu.pipeline_mode<synchronous>, transform_indices = @transform_3, window_bounds = array<i64: 1, 128>}, {pipeline_mode = #tpu.pipeline_mode<synchronous>, transform_indices = @transform_4, window_bounds = array<i64: 128, 128>}, {pipeline_mode = #tpu.pipeline_mode<synchronous>, transform_indices = @transform_5, window_bounds = array<i64: 1, 128>}, {pipeline_mode = #tpu.pipeline_mode<synchronous>, transform_indices = @transform_6, window_bounds = array<i64: 1, 128>}, {pipeline_mode = #tpu.pipeline_mode<synchronous>, transform_indices = @transform_7, window_bounds = array<i64: 128, 128>}, {pipeline_mode = #tpu.pipeline_mode<synchronous>, transform_indices = @transform_8, window_bounds = array<i64: 1, 128>}, {pipeline_mode = #tpu.pipeline_mode<synchronous>, transform_indices = @transform_9, window_bounds = array<i64: 1, 128>}, {pipeline_mode = #tpu.pipeline_mode<synchronous>, transform_indices = @transform_10, window_bounds = array<i64: 128, 128>}, {pipeline_mode = #tpu.pipeline_mode<synchronous>, transform_indices = @transform_11, window_bounds = array<i64: 1, 128>}, {pipeline_mode = #tpu.pipeline_mode<synchronous>, transform_indices = @transform_12, window_bounds = array<i64: 1, 128>}, {pipeline_mode = #tpu.pipeline_mode<synchronous>, transform_indices = @transform_13, window_bounds = array<i64: 128, 128>}, {pipeline_mode = #tpu.pipeline_mode<synchronous>, transform_indices = @transform_14, window_bounds = array<i64: 1, 128>}, {pipeline_mode = #tpu.pipeline_mode<synchronous>, transform_indices = @transform_15, window_bounds = array<i64: 1, 128>}, {pipeline_mode = #tpu.pipeline_mode<synchronous>, transform_indices = @transform_16, window_bounds = array<i64: 128, 128>}, {pipeline_mode = #tpu.pipeline_mode<synchronous>, transform_indices = @transform_17, window_bounds = array<i64: 1, 128>}, {pipeline_mode = #tpu.pipeline_mode<synchronous>, transform_indices = @transform_18, window_bounds = array<i64: 1, 128>}, {pipeline_mode = #tpu.pipeline_mode<synchronous>, transform_indices = @transform_19, window_bounds = array<i64: 128, 256>}, {pipeline_mode = #tpu.pipeline_mode<synchronous>, transform_indices = @transform_20, window_bounds = array<i64: 1, 256>}, {transform_indices = @transform_21, window_bounds = array<i64: 1, 8, 256>}]} {
    %c0 = arith.constant 0 : index
    %c0_0 = arith.constant 0 : index
    %c0_1 = arith.constant 0 : index
    %0 = vector.load %arg1[%c0, %c0_0, %c0_1] : memref<1x8x128xbf16, #tpu.memory_space<vmem>>, vector<1x8x128xbf16>
    %1 = vector.shape_cast %0 : vector<1x8x128xbf16> to vector<8x128xbf16>
    %c0_2 = arith.constant 0 : index
    %c0_3 = arith.constant 0 : index
    %2 = vector.load %arg2[%c0_2, %c0_3] : memref<128x128xbf16, #tpu.memory_space<vmem>>, vector<128x128xbf16>
    %c0_4 = arith.constant 0 : index
    %c0_5 = arith.constant 0 : index
    %3 = vector.load %arg3[%c0_4, %c0_5] : memref<1x128xf32, #tpu.memory_space<vmem>>, vector<1x128xf32>
    %c0_6 = arith.constant 0 : index
    %c0_7 = arith.constant 0 : index
    %4 = vector.load %arg4[%c0_6, %c0_7] : memref<1x128xf32, #tpu.memory_space<vmem>>, vector<1x128xf32>
    %cst = arith.constant dense<0.000000e+00> : vector<8x128xf32>
    %5 = tpu.matmul %1, %2, %cst {dimension_numbers = #tpu.dot_dimension_numbers<[1], [0], [0], [1], [0, 0, 1, 1], [], []>} : vector<8x128xbf16>, vector<128x128xbf16>, vector<8x128xf32> -> vector<8x128xf32>
    %cst_8 = arith.constant dense<0.000000e+00> : vector<128xf32>
    %6 = vector.multi_reduction <add>, %5, %cst_8 [0] : vector<8x128xf32> to vector<128xf32>
    %7 = vector.shape_cast %6 : vector<128xf32> to vector<1x128xf32>
    %8 = arith.mulf %5, %5 : vector<8x128xf32>
    %cst_9 = arith.constant dense<0.000000e+00> : vector<128xf32>
    %9 = vector.multi_reduction <add>, %8, %cst_9 [0] : vector<8x128xf32> to vector<128xf32>
    %10 = vector.shape_cast %9 : vector<128xf32> to vector<1x128xf32>
    %cst_10 = arith.constant 1.250000e-01 : f32
    %11 = vector.broadcast %cst_10 : f32 to vector<1x128xf32>
    %12 = arith.mulf %7, %11 : vector<1x128xf32>
    %cst_11 = arith.constant 1.250000e-01 : f32
    %13 = vector.broadcast %cst_11 : f32 to vector<1x128xf32>
    %14 = arith.mulf %10, %13 : vector<1x128xf32>
    %15 = arith.mulf %12, %12 : vector<1x128xf32>
    %16 = arith.subf %14, %15 : vector<1x128xf32>
    %cst_12 = arith.constant 0.000000e+00 : f32
    %17 = vector.broadcast %cst_12 : f32 to vector<1x128xf32>
    %18 = arith.maximumf %16, %17 : vector<1x128xf32>
    %cst_13 = arith.constant 8.000000e-01 : f32
    %19 = vector.broadcast %cst_13 : f32 to vector<1x128xf32>
    %20 = arith.addf %18, %19 : vector<1x128xf32>
    %21 = math.rsqrt %20 : vector<1x128xf32>
    %22 = arith.mulf %3, %21 : vector<1x128xf32>
    %23 = arith.mulf %12, %22 : vector<1x128xf32>
    %24 = arith.subf %4, %23 : vector<1x128xf32>
    %25 = vector.broadcast %22 : vector<1x128xf32> to vector<8x128xf32>
    %26 = arith.mulf %5, %25 : vector<8x128xf32>
    %27 = vector.broadcast %24 : vector<1x128xf32> to vector<8x128xf32>
    %28 = arith.addf %26, %27 : vector<8x128xf32>
    %cst_14 = arith.constant 0.000000e+00 : f32
    %29 = vector.broadcast %cst_14 : f32 to vector<8x128xf32>
    %30 = arith.cmpf ogt, %28, %29 : vector<8x128xf32>
    %cst_15 = arith.constant 2.000000e-01 : f32
    %31 = vector.broadcast %cst_15 : f32 to vector<8x128xf32>
    %32 = arith.mulf %31, %28 : vector<8x128xf32>
    %33 = arith.select %30, %28, %32 : vector<8x128xi1>, vector<8x128xf32>
    %34 = arith.truncf %33 : vector<8x128xf32> to vector<8x128xbf16>
    %c0_16 = arith.constant 0 : index
    %c0_17 = arith.constant 0 : index
    %35 = vector.load %arg5[%c0_16, %c0_17] : memref<128x128xbf16, #tpu.memory_space<vmem>>, vector<128x128xbf16>
    %c0_18 = arith.constant 0 : index
    %c0_19 = arith.constant 0 : index
    %36 = vector.load %arg6[%c0_18, %c0_19] : memref<1x128xf32, #tpu.memory_space<vmem>>, vector<1x128xf32>
    %c0_20 = arith.constant 0 : index
    %c0_21 = arith.constant 0 : index
    %37 = vector.load %arg7[%c0_20, %c0_21] : memref<1x128xf32, #tpu.memory_space<vmem>>, vector<1x128xf32>
    %cst_22 = arith.constant dense<0.000000e+00> : vector<8x128xf32>
    %38 = tpu.matmul %34, %35, %cst_22 {dimension_numbers = #tpu.dot_dimension_numbers<[1], [0], [0], [1], [0, 0, 1, 1], [], []>} : vector<8x128xbf16>, vector<128x128xbf16>, vector<8x128xf32> -> vector<8x128xf32>
    %cst_23 = arith.constant dense<0.000000e+00> : vector<128xf32>
    %39 = vector.multi_reduction <add>, %38, %cst_23 [0] : vector<8x128xf32> to vector<128xf32>
    %40 = vector.shape_cast %39 : vector<128xf32> to vector<1x128xf32>
    %41 = arith.mulf %38, %38 : vector<8x128xf32>
    %cst_24 = arith.constant dense<0.000000e+00> : vector<128xf32>
    %42 = vector.multi_reduction <add>, %41, %cst_24 [0] : vector<8x128xf32> to vector<128xf32>
    %43 = vector.shape_cast %42 : vector<128xf32> to vector<1x128xf32>
    %cst_25 = arith.constant 1.250000e-01 : f32
    %44 = vector.broadcast %cst_25 : f32 to vector<1x128xf32>
    %45 = arith.mulf %40, %44 : vector<1x128xf32>
    %cst_26 = arith.constant 1.250000e-01 : f32
    %46 = vector.broadcast %cst_26 : f32 to vector<1x128xf32>
    %47 = arith.mulf %43, %46 : vector<1x128xf32>
    %48 = arith.mulf %45, %45 : vector<1x128xf32>
    %49 = arith.subf %47, %48 : vector<1x128xf32>
    %cst_27 = arith.constant 0.000000e+00 : f32
    %50 = vector.broadcast %cst_27 : f32 to vector<1x128xf32>
    %51 = arith.maximumf %49, %50 : vector<1x128xf32>
    %cst_28 = arith.constant 8.000000e-01 : f32
    %52 = vector.broadcast %cst_28 : f32 to vector<1x128xf32>
    %53 = arith.addf %51, %52 : vector<1x128xf32>
    %54 = math.rsqrt %53 : vector<1x128xf32>
    %55 = arith.mulf %36, %54 : vector<1x128xf32>
    %56 = arith.mulf %45, %55 : vector<1x128xf32>
    %57 = arith.subf %37, %56 : vector<1x128xf32>
    %58 = vector.broadcast %55 : vector<1x128xf32> to vector<8x128xf32>
    %59 = arith.mulf %38, %58 : vector<8x128xf32>
    %60 = vector.broadcast %57 : vector<1x128xf32> to vector<8x128xf32>
    %61 = arith.addf %59, %60 : vector<8x128xf32>
    %cst_29 = arith.constant 0.000000e+00 : f32
    %62 = vector.broadcast %cst_29 : f32 to vector<8x128xf32>
    %63 = arith.cmpf ogt, %61, %62 : vector<8x128xf32>
    %cst_30 = arith.constant 2.000000e-01 : f32
    %64 = vector.broadcast %cst_30 : f32 to vector<8x128xf32>
    %65 = arith.mulf %64, %61 : vector<8x128xf32>
    %66 = arith.select %63, %61, %65 : vector<8x128xi1>, vector<8x128xf32>
    %67 = arith.truncf %66 : vector<8x128xf32> to vector<8x128xbf16>
    %c0_31 = arith.constant 0 : index
    %c0_32 = arith.constant 0 : index
    %68 = vector.load %arg8[%c0_31, %c0_32] : memref<128x128xbf16, #tpu.memory_space<vmem>>, vector<128x128xbf16>
    %c0_33 = arith.constant 0 : index
    %c0_34 = arith.constant 0 : index
    %69 = vector.load %arg9[%c0_33, %c0_34] : memref<1x128xf32, #tpu.memory_space<vmem>>, vector<1x128xf32>
    %c0_35 = arith.constant 0 : index
    %c0_36 = arith.constant 0 : index
    %70 = vector.load %arg10[%c0_35, %c0_36] : memref<1x128xf32, #tpu.memory_space<vmem>>, vector<1x128xf32>
    %cst_37 = arith.constant dense<0.000000e+00> : vector<8x128xf32>
    %71 = tpu.matmul %67, %68, %cst_37 {dimension_numbers = #tpu.dot_dimension_numbers<[1], [0], [0], [1], [0, 0, 1, 1], [], []>} : vector<8x128xbf16>, vector<128x128xbf16>, vector<8x128xf32> -> vector<8x128xf32>
    %cst_38 = arith.constant dense<0.000000e+00> : vector<128xf32>
    %72 = vector.multi_reduction <add>, %71, %cst_38 [0] : vector<8x128xf32> to vector<128xf32>
    %73 = vector.shape_cast %72 : vector<128xf32> to vector<1x128xf32>
    %74 = arith.mulf %71, %71 : vector<8x128xf32>
    %cst_39 = arith.constant dense<0.000000e+00> : vector<128xf32>
    %75 = vector.multi_reduction <add>, %74, %cst_39 [0] : vector<8x128xf32> to vector<128xf32>
    %76 = vector.shape_cast %75 : vector<128xf32> to vector<1x128xf32>
    %cst_40 = arith.constant 1.250000e-01 : f32
    %77 = vector.broadcast %cst_40 : f32 to vector<1x128xf32>
    %78 = arith.mulf %73, %77 : vector<1x128xf32>
    %cst_41 = arith.constant 1.250000e-01 : f32
    %79 = vector.broadcast %cst_41 : f32 to vector<1x128xf32>
    %80 = arith.mulf %76, %79 : vector<1x128xf32>
    %81 = arith.mulf %78, %78 : vector<1x128xf32>
    %82 = arith.subf %80, %81 : vector<1x128xf32>
    %cst_42 = arith.constant 0.000000e+00 : f32
    %83 = vector.broadcast %cst_42 : f32 to vector<1x128xf32>
    %84 = arith.maximumf %82, %83 : vector<1x128xf32>
    %cst_43 = arith.constant 8.000000e-01 : f32
    %85 = vector.broadcast %cst_43 : f32 to vector<1x128xf32>
    %86 = arith.addf %84, %85 : vector<1x128xf32>
    %87 = math.rsqrt %86 : vector<1x128xf32>
    %88 = arith.mulf %69, %87 : vector<1x128xf32>
    %89 = arith.mulf %78, %88 : vector<1x128xf32>
    %90 = arith.subf %70, %89 : vector<1x128xf32>
    %91 = vector.broadcast %88 : vector<1x128xf32> to vector<8x128xf32>
    %92 = arith.mulf %71, %91 : vector<8x128xf32>
    %93 = vector.broadcast %90 : vector<1x128xf32> to vector<8x128xf32>
    %94 = arith.addf %92, %93 : vector<8x128xf32>
    %cst_44 = arith.constant 0.000000e+00 : f32
    %95 = vector.broadcast %cst_44 : f32 to vector<8x128xf32>
    %96 = arith.cmpf ogt, %94, %95 : vector<8x128xf32>
    %cst_45 = arith.constant 2.000000e-01 : f32
    %97 = vector.broadcast %cst_45 : f32 to vector<8x128xf32>
    %98 = arith.mulf %97, %94 : vector<8x128xf32>
    %99 = arith.select %96, %94, %98 : vector<8x128xi1>, vector<8x128xf32>
    %100 = arith.truncf %99 : vector<8x128xf32> to vector<8x128xbf16>
    %c0_46 = arith.constant 0 : index
    %c0_47 = arith.constant 0 : index
    %101 = vector.load %arg11[%c0_46, %c0_47] : memref<128x128xbf16, #tpu.memory_space<vmem>>, vector<128x128xbf16>
    %c0_48 = arith.constant 0 : index
    %c0_49 = arith.constant 0 : index
    %102 = vector.load %arg12[%c0_48, %c0_49] : memref<1x128xf32, #tpu.memory_space<vmem>>, vector<1x128xf32>
    %c0_50 = arith.constant 0 : index
    %c0_51 = arith.constant 0 : index
    %103 = vector.load %arg13[%c0_50, %c0_51] : memref<1x128xf32, #tpu.memory_space<vmem>>, vector<1x128xf32>
    %cst_52 = arith.constant dense<0.000000e+00> : vector<8x128xf32>
    %104 = tpu.matmul %100, %101, %cst_52 {dimension_numbers = #tpu.dot_dimension_numbers<[1], [0], [0], [1], [0, 0, 1, 1], [], []>} : vector<8x128xbf16>, vector<128x128xbf16>, vector<8x128xf32> -> vector<8x128xf32>
    %cst_53 = arith.constant dense<0.000000e+00> : vector<128xf32>
    %105 = vector.multi_reduction <add>, %104, %cst_53 [0] : vector<8x128xf32> to vector<128xf32>
    %106 = vector.shape_cast %105 : vector<128xf32> to vector<1x128xf32>
    %107 = arith.mulf %104, %104 : vector<8x128xf32>
    %cst_54 = arith.constant dense<0.000000e+00> : vector<128xf32>
    %108 = vector.multi_reduction <add>, %107, %cst_54 [0] : vector<8x128xf32> to vector<128xf32>
    %109 = vector.shape_cast %108 : vector<128xf32> to vector<1x128xf32>
    %cst_55 = arith.constant 1.250000e-01 : f32
    %110 = vector.broadcast %cst_55 : f32 to vector<1x128xf32>
    %111 = arith.mulf %106, %110 : vector<1x128xf32>
    %cst_56 = arith.constant 1.250000e-01 : f32
    %112 = vector.broadcast %cst_56 : f32 to vector<1x128xf32>
    %113 = arith.mulf %109, %112 : vector<1x128xf32>
    %114 = arith.mulf %111, %111 : vector<1x128xf32>
    %115 = arith.subf %113, %114 : vector<1x128xf32>
    %cst_57 = arith.constant 0.000000e+00 : f32
    %116 = vector.broadcast %cst_57 : f32 to vector<1x128xf32>
    %117 = arith.maximumf %115, %116 : vector<1x128xf32>
    %cst_58 = arith.constant 8.000000e-01 : f32
    %118 = vector.broadcast %cst_58 : f32 to vector<1x128xf32>
    %119 = arith.addf %117, %118 : vector<1x128xf32>
    %120 = math.rsqrt %119 : vector<1x128xf32>
    %121 = arith.mulf %102, %120 : vector<1x128xf32>
    %122 = arith.mulf %111, %121 : vector<1x128xf32>
    %123 = arith.subf %103, %122 : vector<1x128xf32>
    %124 = vector.broadcast %121 : vector<1x128xf32> to vector<8x128xf32>
    %125 = arith.mulf %104, %124 : vector<8x128xf32>
    %126 = vector.broadcast %123 : vector<1x128xf32> to vector<8x128xf32>
    %127 = arith.addf %125, %126 : vector<8x128xf32>
    %cst_59 = arith.constant 0.000000e+00 : f32
    %128 = vector.broadcast %cst_59 : f32 to vector<8x128xf32>
    %129 = arith.cmpf ogt, %127, %128 : vector<8x128xf32>
    %cst_60 = arith.constant 2.000000e-01 : f32
    %130 = vector.broadcast %cst_60 : f32 to vector<8x128xf32>
    %131 = arith.mulf %130, %127 : vector<8x128xf32>
    %132 = arith.select %129, %127, %131 : vector<8x128xi1>, vector<8x128xf32>
    %133 = arith.truncf %132 : vector<8x128xf32> to vector<8x128xbf16>
    %c0_61 = arith.constant 0 : index
    %c0_62 = arith.constant 0 : index
    %134 = vector.load %arg14[%c0_61, %c0_62] : memref<128x128xbf16, #tpu.memory_space<vmem>>, vector<128x128xbf16>
    %c0_63 = arith.constant 0 : index
    %c0_64 = arith.constant 0 : index
    %135 = vector.load %arg15[%c0_63, %c0_64] : memref<1x128xf32, #tpu.memory_space<vmem>>, vector<1x128xf32>
    %c0_65 = arith.constant 0 : index
    %c0_66 = arith.constant 0 : index
    %136 = vector.load %arg16[%c0_65, %c0_66] : memref<1x128xf32, #tpu.memory_space<vmem>>, vector<1x128xf32>
    %cst_67 = arith.constant dense<0.000000e+00> : vector<8x128xf32>
    %137 = tpu.matmul %133, %134, %cst_67 {dimension_numbers = #tpu.dot_dimension_numbers<[1], [0], [0], [1], [0, 0, 1, 1], [], []>} : vector<8x128xbf16>, vector<128x128xbf16>, vector<8x128xf32> -> vector<8x128xf32>
    %cst_68 = arith.constant dense<0.000000e+00> : vector<128xf32>
    %138 = vector.multi_reduction <add>, %137, %cst_68 [0] : vector<8x128xf32> to vector<128xf32>
    %139 = vector.shape_cast %138 : vector<128xf32> to vector<1x128xf32>
    %140 = arith.mulf %137, %137 : vector<8x128xf32>
    %cst_69 = arith.constant dense<0.000000e+00> : vector<128xf32>
    %141 = vector.multi_reduction <add>, %140, %cst_69 [0] : vector<8x128xf32> to vector<128xf32>
    %142 = vector.shape_cast %141 : vector<128xf32> to vector<1x128xf32>
    %cst_70 = arith.constant 1.250000e-01 : f32
    %143 = vector.broadcast %cst_70 : f32 to vector<1x128xf32>
    %144 = arith.mulf %139, %143 : vector<1x128xf32>
    %cst_71 = arith.constant 1.250000e-01 : f32
    %145 = vector.broadcast %cst_71 : f32 to vector<1x128xf32>
    %146 = arith.mulf %142, %145 : vector<1x128xf32>
    %147 = arith.mulf %144, %144 : vector<1x128xf32>
    %148 = arith.subf %146, %147 : vector<1x128xf32>
    %cst_72 = arith.constant 0.000000e+00 : f32
    %149 = vector.broadcast %cst_72 : f32 to vector<1x128xf32>
    %150 = arith.maximumf %148, %149 : vector<1x128xf32>
    %cst_73 = arith.constant 8.000000e-01 : f32
    %151 = vector.broadcast %cst_73 : f32 to vector<1x128xf32>
    %152 = arith.addf %150, %151 : vector<1x128xf32>
    %153 = math.rsqrt %152 : vector<1x128xf32>
    %154 = arith.mulf %135, %153 : vector<1x128xf32>
    %155 = arith.mulf %144, %154 : vector<1x128xf32>
    %156 = arith.subf %136, %155 : vector<1x128xf32>
    %157 = vector.broadcast %154 : vector<1x128xf32> to vector<8x128xf32>
    %158 = arith.mulf %137, %157 : vector<8x128xf32>
    %159 = vector.broadcast %156 : vector<1x128xf32> to vector<8x128xf32>
    %160 = arith.addf %158, %159 : vector<8x128xf32>
    %cst_74 = arith.constant 0.000000e+00 : f32
    %161 = vector.broadcast %cst_74 : f32 to vector<8x128xf32>
    %162 = arith.cmpf ogt, %160, %161 : vector<8x128xf32>
    %cst_75 = arith.constant 2.000000e-01 : f32
    %163 = vector.broadcast %cst_75 : f32 to vector<8x128xf32>
    %164 = arith.mulf %163, %160 : vector<8x128xf32>
    %165 = arith.select %162, %160, %164 : vector<8x128xi1>, vector<8x128xf32>
    %166 = arith.truncf %165 : vector<8x128xf32> to vector<8x128xbf16>
    %c0_76 = arith.constant 0 : index
    %c0_77 = arith.constant 0 : index
    %167 = vector.load %arg17[%c0_76, %c0_77] : memref<128x128xbf16, #tpu.memory_space<vmem>>, vector<128x128xbf16>
    %c0_78 = arith.constant 0 : index
    %c0_79 = arith.constant 0 : index
    %168 = vector.load %arg18[%c0_78, %c0_79] : memref<1x128xf32, #tpu.memory_space<vmem>>, vector<1x128xf32>
    %c0_80 = arith.constant 0 : index
    %c0_81 = arith.constant 0 : index
    %169 = vector.load %arg19[%c0_80, %c0_81] : memref<1x128xf32, #tpu.memory_space<vmem>>, vector<1x128xf32>
    %cst_82 = arith.constant dense<0.000000e+00> : vector<8x128xf32>
    %170 = tpu.matmul %166, %167, %cst_82 {dimension_numbers = #tpu.dot_dimension_numbers<[1], [0], [0], [1], [0, 0, 1, 1], [], []>} : vector<8x128xbf16>, vector<128x128xbf16>, vector<8x128xf32> -> vector<8x128xf32>
    %cst_83 = arith.constant dense<0.000000e+00> : vector<128xf32>
    %171 = vector.multi_reduction <add>, %170, %cst_83 [0] : vector<8x128xf32> to vector<128xf32>
    %172 = vector.shape_cast %171 : vector<128xf32> to vector<1x128xf32>
    %173 = arith.mulf %170, %170 : vector<8x128xf32>
    %cst_84 = arith.constant dense<0.000000e+00> : vector<128xf32>
    %174 = vector.multi_reduction <add>, %173, %cst_84 [0] : vector<8x128xf32> to vector<128xf32>
    %175 = vector.shape_cast %174 : vector<128xf32> to vector<1x128xf32>
    %cst_85 = arith.constant 1.250000e-01 : f32
    %176 = vector.broadcast %cst_85 : f32 to vector<1x128xf32>
    %177 = arith.mulf %172, %176 : vector<1x128xf32>
    %cst_86 = arith.constant 1.250000e-01 : f32
    %178 = vector.broadcast %cst_86 : f32 to vector<1x128xf32>
    %179 = arith.mulf %175, %178 : vector<1x128xf32>
    %180 = arith.mulf %177, %177 : vector<1x128xf32>
    %181 = arith.subf %179, %180 : vector<1x128xf32>
    %cst_87 = arith.constant 0.000000e+00 : f32
    %182 = vector.broadcast %cst_87 : f32 to vector<1x128xf32>
    %183 = arith.maximumf %181, %182 : vector<1x128xf32>
    %cst_88 = arith.constant 8.000000e-01 : f32
    %184 = vector.broadcast %cst_88 : f32 to vector<1x128xf32>
    %185 = arith.addf %183, %184 : vector<1x128xf32>
    %186 = math.rsqrt %185 : vector<1x128xf32>
    %187 = arith.mulf %168, %186 : vector<1x128xf32>
    %188 = arith.mulf %177, %187 : vector<1x128xf32>
    %189 = arith.subf %169, %188 : vector<1x128xf32>
    %190 = vector.broadcast %187 : vector<1x128xf32> to vector<8x128xf32>
    %191 = arith.mulf %170, %190 : vector<8x128xf32>
    %192 = vector.broadcast %189 : vector<1x128xf32> to vector<8x128xf32>
    %193 = arith.addf %191, %192 : vector<8x128xf32>
    %cst_89 = arith.constant 0.000000e+00 : f32
    %194 = vector.broadcast %cst_89 : f32 to vector<8x128xf32>
    %195 = arith.cmpf ogt, %193, %194 : vector<8x128xf32>
    %cst_90 = arith.constant 2.000000e-01 : f32
    %196 = vector.broadcast %cst_90 : f32 to vector<8x128xf32>
    %197 = arith.mulf %196, %193 : vector<8x128xf32>
    %198 = arith.select %195, %193, %197 : vector<8x128xi1>, vector<8x128xf32>
    %199 = arith.truncf %198 : vector<8x128xf32> to vector<8x128xbf16>
    %c0_91 = arith.constant 0 : index
    %c0_92 = arith.constant 0 : index
    %200 = vector.load %arg20[%c0_91, %c0_92] : memref<128x256xbf16, #tpu.memory_space<vmem>>, vector<128x256xbf16>
    %c0_93 = arith.constant 0 : index
    %c0_94 = arith.constant 0 : index
    %201 = vector.load %arg21[%c0_93, %c0_94] : memref<1x256xf32, #tpu.memory_space<vmem>>, vector<1x256xf32>
    %cst_95 = arith.constant dense<0.000000e+00> : vector<8x256xf32>
    %202 = tpu.matmul %199, %200, %cst_95 {dimension_numbers = #tpu.dot_dimension_numbers<[1], [0], [0], [1], [0, 0, 1, 1], [], []>} : vector<8x128xbf16>, vector<128x256xbf16>, vector<8x256xf32> -> vector<8x256xf32>
    %203 = vector.broadcast %201 : vector<1x256xf32> to vector<8x256xf32>
    %204 = arith.addf %202, %203 : vector<8x256xf32>
    %205 = math.tanh %204 : vector<8x256xf32>
    %c0_96 = arith.constant 0 : index
    %c0_97 = arith.constant 0 : index
    %c0_98 = arith.constant 0 : index
    %206 = vector.load %arg22[%c0_96, %c0_97, %c0_98] : memref<1x8x256xf32, #tpu.memory_space<vmem>>, vector<1x8x256xf32>
    %207 = vector.shape_cast %206 : vector<1x8x256xf32> to vector<8x256xf32>
    %208 = vector.shape_cast %205 : vector<8x256xf32> to vector<1x8x256xf32>
    tpu.vector_store %arg22[%c0_96, %c0_97, %c0_98], %208 {strides = array<i32>} : memref<1x8x256xf32, #tpu.memory_space<vmem>>, vector<1x8x256xf32>,
    return
  }
  func.func @transform_0(%arg0: i32) -> (i32, i32, i32) {
    %c0_i32 = arith.constant 0 : i32
    %c0_i32_0 = arith.constant 0 : i32
    %c0_i32_1 = arith.constant 0 : i32
    return %arg0, %c0_i32, %c0_i32_0 : i32, i32, i32
  }
  func.func @transform_1(%arg0: i32) -> (i32, i32) {
    %c0_i32 = arith.constant 0 : i32
    %c0_i32_0 = arith.constant 0 : i32
    %c0_i32_1 = arith.constant 0 : i32
    return %c0_i32, %c0_i32_0 : i32, i32
  }
  func.func @transform_2(%arg0: i32) -> (i32, i32) {
    %c0_i32 = arith.constant 0 : i32
    %c0_i32_0 = arith.constant 0 : i32
    %c0_i32_1 = arith.constant 0 : i32
    return %c0_i32, %c0_i32_0 : i32, i32
  }
  func.func @transform_3(%arg0: i32) -> (i32, i32) {
    %c0_i32 = arith.constant 0 : i32
    %c0_i32_0 = arith.constant 0 : i32
    %c0_i32_1 = arith.constant 0 : i32
    return %c0_i32, %c0_i32_0 : i32, i32
  }
  func.func @transform_4(%arg0: i32) -> (i32, i32) {
    %c0_i32 = arith.constant 0 : i32
    %c0_i32_0 = arith.constant 0 : i32
    %c0_i32_1 = arith.constant 0 : i32
    return %c0_i32, %c0_i32_0 : i32, i32
  }
  func.func @transform_5(%arg0: i32) -> (i32, i32) {
    %c0_i32 = arith.constant 0 : i32
    %c0_i32_0 = arith.constant 0 : i32
    %c0_i32_1 = arith.constant 0 : i32
    return %c0_i32, %c0_i32_0 : i32, i32
  }
  func.func @transform_6(%arg0: i32) -> (i32, i32) {
    %c0_i32 = arith.constant 0 : i32
    %c0_i32_0 = arith.constant 0 : i32
    %c0_i32_1 = arith.constant 0 : i32
    return %c0_i32, %c0_i32_0 : i32, i32
  }
  func.func @transform_7(%arg0: i32) -> (i32, i32) {
    %c0_i32 = arith.constant 0 : i32
    %c0_i32_0 = arith.constant 0 : i32
    %c0_i32_1 = arith.constant 0 : i32
    return %c0_i32, %c0_i32_0 : i32, i32
  }
  func.func @transform_8(%arg0: i32) -> (i32, i32) {
    %c0_i32 = arith.constant 0 : i32
    %c0_i32_0 = arith.constant 0 : i32
    %c0_i32_1 = arith.constant 0 : i32
    return %c0_i32, %c0_i32_0 : i32, i32
  }
  func.func @transform_9(%arg0: i32) -> (i32, i32) {
    %c0_i32 = arith.constant 0 : i32
    %c0_i32_0 = arith.constant 0 : i32
    %c0_i32_1 = arith.constant 0 : i32
    return %c0_i32, %c0_i32_0 : i32, i32
  }
  func.func @transform_10(%arg0: i32) -> (i32, i32) {
    %c0_i32 = arith.constant 0 : i32
    %c0_i32_0 = arith.constant 0 : i32
    %c0_i32_1 = arith.constant 0 : i32
    return %c0_i32, %c0_i32_0 : i32, i32
  }
  func.func @transform_11(%arg0: i32) -> (i32, i32) {
    %c0_i32 = arith.constant 0 : i32
    %c0_i32_0 = arith.constant 0 : i32
    %c0_i32_1 = arith.constant 0 : i32
    return %c0_i32, %c0_i32_0 : i32, i32
  }
  func.func @transform_12(%arg0: i32) -> (i32, i32) {
    %c0_i32 = arith.constant 0 : i32
    %c0_i32_0 = arith.constant 0 : i32
    %c0_i32_1 = arith.constant 0 : i32
    return %c0_i32, %c0_i32_0 : i32, i32
  }
  func.func @transform_13(%arg0: i32) -> (i32, i32) {
    %c0_i32 = arith.constant 0 : i32
    %c0_i32_0 = arith.constant 0 : i32
    %c0_i32_1 = arith.constant 0 : i32
    return %c0_i32, %c0_i32_0 : i32, i32
  }
  func.func @transform_14(%arg0: i32) -> (i32, i32) {
    %c0_i32 = arith.constant 0 : i32
    %c0_i32_0 = arith.constant 0 : i32
    %c0_i32_1 = arith.constant 0 : i32
    return %c0_i32, %c0_i32_0 : i32, i32
  }
  func.func @transform_15(%arg0: i32) -> (i32, i32) {
    %c0_i32 = arith.constant 0 : i32
    %c0_i32_0 = arith.constant 0 : i32
    %c0_i32_1 = arith.constant 0 : i32
    return %c0_i32, %c0_i32_0 : i32, i32
  }
  func.func @transform_16(%arg0: i32) -> (i32, i32) {
    %c0_i32 = arith.constant 0 : i32
    %c0_i32_0 = arith.constant 0 : i32
    %c0_i32_1 = arith.constant 0 : i32
    return %c0_i32, %c0_i32_0 : i32, i32
  }
  func.func @transform_17(%arg0: i32) -> (i32, i32) {
    %c0_i32 = arith.constant 0 : i32
    %c0_i32_0 = arith.constant 0 : i32
    %c0_i32_1 = arith.constant 0 : i32
    return %c0_i32, %c0_i32_0 : i32, i32
  }
  func.func @transform_18(%arg0: i32) -> (i32, i32) {
    %c0_i32 = arith.constant 0 : i32
    %c0_i32_0 = arith.constant 0 : i32
    %c0_i32_1 = arith.constant 0 : i32
    return %c0_i32, %c0_i32_0 : i32, i32
  }
  func.func @transform_19(%arg0: i32) -> (i32, i32) {
    %c0_i32 = arith.constant 0 : i32
    %c0_i32_0 = arith.constant 0 : i32
    %c0_i32_1 = arith.constant 0 : i32
    return %c0_i32, %c0_i32_0 : i32, i32
  }
  func.func @transform_20(%arg0: i32) -> (i32, i32) {
    %c0_i32 = arith.constant 0 : i32
    %c0_i32_0 = arith.constant 0 : i32
    %c0_i32_1 = arith.constant 0 : i32
    return %c0_i32, %c0_i32_0 : i32, i32
  }
  func.func @transform_21(%arg0: i32) -> (i32, i32, i32) {
    %c0_i32 = arith.constant 0 : i32
    %c0_i32_0 = arith.constant 0 : i32
    %c0_i32_1 = arith.constant 0 : i32
    return %arg0, %c0_i32, %c0_i32_0 : i32, i32, i32
  }
}

</mosaic_0001>

<llo_original>
// kernel: tpu_custom_call.1
$region0: #{tpu_custom_call.1}
  #allocation0 [shape = 'u32[]', space=smem, size = 0x4, offset = 0x4, fixed_abs, tag = 'smem constant byte address 0x4 - core index']
  #allocation1 [shape = 'u32[72,128]{1,0:T(1,128)}', space=vmem, size = 0x9000, scoped, tag = 'internal scratch']
  %s0 = inlined_call_operand.hbm [shape: bf16[2,8,128], index: 0, kind: input, shape index: {}]
  %s1 = inlined_call_operand.hbm [shape: bf16[128,128], index: 1, kind: input, shape index: {}]
  %s2 = inlined_call_operand.vmem [shape: f32[1,128], index: 2, kind: input, shape index: {}]
  %s3 = inlined_call_operand.hbm [shape: f32[1,128], index: 3, kind: input, shape index: {}]
  %s4 = inlined_call_operand.hbm [shape: bf16[128,128], index: 4, kind: input, shape index: {}]
  %s5 = inlined_call_operand.vmem [shape: f32[1,128], index: 5, kind: input, shape index: {}]
  %s6 = inlined_call_operand.vmem [shape: f32[1,128], index: 6, kind: input, shape index: {}]
  %s7 = inlined_call_operand.hbm [shape: bf16[128,128], index: 7, kind: input, shape index: {}]
  %s8 = inlined_call_operand.vmem [shape: f32[1,128], index: 8, kind: input, shape index: {}]
  %s9 = inlined_call_operand.vmem [shape: f32[1,128], index: 9, kind: input, shape index: {}]
  %s10 = inlined_call_operand.hbm [shape: bf16[128,128], index: 10, kind: input, shape index: {}]
  %s11 = inlined_call_operand.vmem [shape: f32[1,128], index: 11, kind: input, shape index: {}]
  %s12 = inlined_call_operand.vmem [shape: f32[1,128], index: 12, kind: input, shape index: {}]
  %s13 = inlined_call_operand.hbm [shape: bf16[128,128], index: 13, kind: input, shape index: {}]
  %s14 = inlined_call_operand.vmem [shape: f32[1,128], index: 14, kind: input, shape index: {}]
  %s15 = inlined_call_operand.vmem [shape: f32[1,128], index: 15, kind: input, shape index: {}]
  %s16 = inlined_call_operand.hbm [shape: bf16[128,128], index: 16, kind: input, shape index: {}]
  %s17 = inlined_call_operand.vmem [shape: f32[1,128], index: 17, kind: input, shape index: {}]
  %s18 = inlined_call_operand.vmem [shape: f32[1,128], index: 18, kind: input, shape index: {}]
  %s19 = inlined_call_operand.hbm [shape: bf16[128,256], index: 19, kind: input, shape index: {}]
  %s20 = inlined_call_operand.vmem [shape: f32[1,256], index: 20, kind: input, shape index: {}]
  %s21 = inlined_call_operand.hbm [shape: f32[2,8,256], index: 21, kind: output, shape index: {}]
  %s22 = sld [smem:[#allocation0]]
  $region153: #{tpu_custom_call.1} parent=0
    _
  %s24 = ssub.s32 1, %s22
  %s25 = scalar_select 0, %s24, %s22
  $region1: #{tpu_custom_call.1} parent=0
    #allocation2 [shape = 'u8[4096]{0}', space=vmem, size = 0x1000, scoped, tag = 'input window, operand 0']
    #allocation3 [shape = 's32[2]{0}', space=sflag, size = 0x8, scoped, tag = 'scoped memory for tpu_custom_call.1']
    #allocation4 [shape = 's32[2]{0}', space=sflag, size = 0x8, scoped, tag = 'scoped memory for tpu_custom_call.1']
    #allocation5 [shape = 'u8[32768]{0}', space=vmem, size = 0x8000, scoped, tag = 'input window, operand 1, single buffered']
    #allocation6 [shape = 's32[1]{0}', space=sflag, size = 0x4, scoped, tag = 'scoped memory for tpu_custom_call.1']
    #allocation7 [shape = 'u8[512]{0}', space=vmem, size = 0x400, scoped, tag = 'input window, operand 3, single buffered']
    #allocation8 [shape = 'u8[32768]{0}', space=vmem, size = 0x8000, scoped, tag = 'input window, operand 4, single buffered']
    #allocation9 [shape = 's32[1]{0}', space=sflag, size = 0x4, scoped, tag = 'scoped memory for tpu_custom_call.1']
    #allocation10 [shape = 'u8[32768]{0}', space=vmem, size = 0x8000, scoped, tag = 'input window, operand 7, single buffered']
    #allocation11 [shape = 'u8[32768]{0}', space=vmem, size = 0x8000, scoped, tag = 'input window, operand 10, single buffered']
    #allocation12 [shape = 's32[1]{0}', space=sflag, size = 0x4, scoped, tag = 'scoped memory for tpu_custom_call.1']
    #allocation13 [shape = 'u8[32768]{0}', space=vmem, size = 0x8000, scoped, tag = 'input window, operand 13, single buffered']
    #allocation14 [shape = 'u8[32768]{0}', space=vmem, size = 0x8000, scoped, tag = 'input window, operand 16, single buffered']
    #allocation15 [shape = 's32[1]{0}', space=sflag, size = 0x4, scoped, tag = 'scoped memory for tpu_custom_call.1']
    #allocation16 [shape = 'u8[65536]{0}', space=vmem, size = 0x10000, scoped, tag = 'input window, operand 19, single buffered']
    #allocation17 [shape = 'u8[16384]{0}', space=vmem, size = 0x4000, scoped, tag = 'output window, operand 0']
    %26 = vsyncpa [#allocation3], 0
    %s27 = scalar_lea.sflag [#allocation3], 1
    %28 = vsyncpa %s27, 0
    %29 = vsyncpa [#allocation6], 0
    %30 = vsyncpa [#allocation9], 0
    %31 = vsyncpa [#allocation12], 0
    %32 = vsyncpa [#allocation15], 0
    %33 = vsyncpa [#allocation4], 0
    %s34 = scalar_lea.sflag [#allocation4], 1
    %35 = vsyncpa %s34, 0
    loop: start=0, step=1, limit=4
    $region2: #{tpu_custom_call.1} parent=1 // loop_pre_header
      _
    $region3: #{tpu_custom_call.1} parent=1 // loop_header
      %s37 = sphi 0, %s41
      %p38 = scmp.ge.s32.totalorder %s37, 4
      %s47 = sphi 0, %s49
      %s50 = sphi 0, %s47
      %s51 = sphi 0, %s50
      %s67 = sphi 0, %s51
      %s71 = sphi 0, %s71
      %s73 = sphi 0, %s71
      %s74 = sphi 0, %s73
      %s88 = sphi 0, %s74
      %s92 = sphi 0, %s92
      %s94 = sphi 0, %s92
      %s95 = sphi 0, %s94
      %s109 = sphi 0, %s95
      %s113 = sphi 0, %s113
      %s115 = sphi 0, %s113
      %s116 = sphi 0, %s115
      %s130 = sphi 0, %s116
      %s134 = sphi 0, %s134
      %s136 = sphi 0, %s134
      %s137 = sphi 0, %s136
      %s151 = sphi 0, %s137
      %s155 = sphi 0, %s155
      %s157 = sphi 0, %s155
      %s158 = sphi 0, %s157
      %s172 = sphi 0, %s158
      %s176 = sphi 0, %s176
      %s178 = sphi 0, %s176
      %s179 = sphi 0, %s178
      %s193 = sphi 0, %s179
      %s197 = sphi 0, %s197
      %s199 = sphi 0, %s197
      %s200 = sphi 0, %s199
      %s214 = sphi 0, %s200
      %s218 = sphi 0, %s218
      %s220 = sphi 0, %s218
      %s221 = sphi 0, %s220
      %s235 = sphi 0, %s221
      %s239 = sphi 0, %s239
      %s241 = sphi 0, %s239
      %s242 = sphi 0, %s241
      %s256 = sphi 0, %s242
      %s260 = sphi 0, %s260
      %s262 = sphi 0, %s260
      %s263 = sphi 0, %s262
      %s277 = sphi 0, %s263
      %s281 = sphi 0, %s281
      %s283 = sphi 0, %s281
      %s284 = sphi 0, %s283
      %s298 = sphi 0, %s284
      %s302 = sphi 0, %s302
      %s304 = sphi 0, %s302
      %s305 = sphi 0, %s304
      %s319 = sphi 0, %s305
      %s323 = sphi 0, %s323
      %s325 = sphi 0, %s323
      %s326 = sphi 0, %s325
      %s340 = sphi 0, %s326
      %s344 = sphi 0, %s344
      %s346 = sphi 0, %s344
      %s347 = sphi 0, %s346
      %s361 = sphi 0, %s347
      %s365 = sphi 0, %s365
      %s367 = sphi 0, %s365
      %s368 = sphi 0, %s367
      %s382 = sphi 0, %s368
      %s386 = sphi 0, %s386
      %s388 = sphi 0, %s386
      %s389 = sphi 0, %s388
      %s403 = sphi 0, %s389
      %s407 = sphi 0, %s407
      %s409 = sphi 0, %s407
      %s410 = sphi 0, %s409
      %s424 = sphi 0, %s410
      %s428 = sphi 0, %s428
      %s430 = sphi 0, %s428
      %s431 = sphi 0, %s430
      %s445 = sphi 0, %s431
      %s449 = sphi 0, %s449
      %s451 = sphi 0, %s449
      %s452 = sphi 0, %s451
      %s466 = sphi 0, %s452
      %s470 = sphi 0, %s470
      %s472 = sphi 0, %s470
      %s473 = sphi 0, %s472
      %s487 = sphi 0, %s473
      %s493 = sphi 0, %s495
      %s496 = sphi 0, %s493
      %s497 = sphi 0, %s496
      %s513 = sphi 0, %s497
    $region4: #{tpu_custom_call.1} parent=1 // loop_header_branch
      %40 = sbr.rel (%p38) target = $region8
    $region5: #{tpu_custom_call.1} parent=1 // loop_body
      %s42 = ssub.s32 %s37, 1
      %s43 = ssub.s32 %s37, 2
      %s44 = sadd.s32 %s37, 1
      %s45 = ssub.s32 %s37, %s44
      %p46 = scmp.eq.s32.totalorder %s45, 0
      %s48 = sadd.s32 %s47, 1
      %s49 = scalar_select %p46, %s47, %s48
      %p52 = pneg %p46
      %p53 = scmp.eq.s32.totalorder %s37, 1
      %p54 = por %p52, %p53
      %p55 = scmp.ne.s32.totalorder %s47, %s50
      %p56 = scmp.eq.s32.totalorder %s37, 0
      %p57 = por %p55, %p56
      %p58 = scmp.ne.s32.totalorder %s47, %s50
      %p59 = scmp.eq.s32.totalorder %s42, 1
      %p60 = por %p58, %p59
      %p61 = scmp.ne.s32.totalorder %s50, %s51
      %p62 = scmp.eq.s32.totalorder %s42, 0
      %p63 = por %p61, %p62
      %p64 = scmp.ne.s32.totalorder %s50, %s51
      %p65 = scmp.eq.s32.totalorder %s43, 1
      %p66 = por %p64, %p65
      %p68 = scmp.ne.s32.totalorder %s51, %s67
      %p69 = scmp.eq.s32.totalorder %s43, 0
      %p70 = por %p68, %p69
      %s72 = sadd.s32 %s71, 1
      %p75 = scmp.eq.s32.totalorder %s37, 1
      %p76 = scmp.ne.s32.totalorder %s71, %s73
      %p77 = scmp.eq.s32.totalorder %s37, 0
      %p78 = por %p76, %p77
      %p79 = scmp.ne.s32.totalorder %s71, %s73
      %p80 = scmp.eq.s32.totalorder %s42, 1
      %p81 = por %p79, %p80
      %p82 = scmp.ne.s32.totalorder %s73, %s74
      %p83 = scmp.eq.s32.totalorder %s42, 0
      %p84 = por %p82, %p83
      %p85 = scmp.ne.s32.totalorder %s73, %s74
      %p86 = scmp.eq.s32.totalorder %s43, 1
      %p87 = por %p85, %p86
      %p89 = scmp.ne.s32.totalorder %s74, %s88
      %p90 = scmp.eq.s32.totalorder %s43, 0
      %p91 = por %p89, %p90
      %s93 = sadd.s32 %s92, 1
      %p96 = scmp.eq.s32.totalorder %s37, 1
      %p97 = scmp.ne.s32.totalorder %s92, %s94
      %p98 = scmp.eq.s32.totalorder %s37, 0
      %p99 = por %p97, %p98
      %p100 = scmp.ne.s32.totalorder %s92, %s94
      %p101 = scmp.eq.s32.totalorder %s42, 1
      %p102 = por %p100, %p101
      %p103 = scmp.ne.s32.totalorder %s94, %s95
      %p104 = scmp.eq.s32.totalorder %s42, 0
      %p105 = por %p103, %p104
      %p106 = scmp.ne.s32.totalorder %s94, %s95
      %p107 = scmp.eq.s32.totalorder %s43, 1
      %p108 = por %p106, %p107
      %p110 = scmp.ne.s32.totalorder %s95, %s109
      %p111 = scmp.eq.s32.totalorder %s43, 0
      %p112 = por %p110, %p111
      %s114 = sadd.s32 %s113, 1
      %p117 = scmp.eq.s32.totalorder %s37, 1
      %p118 = scmp.ne.s32.totalorder %s113, %s115
      %p119 = scmp.eq.s32.totalorder %s37, 0
      %p120 = por %p118, %p119
      %p121 = scmp.ne.s32.totalorder %s113, %s115
      %p122 = scmp.eq.s32.totalorder %s42, 1
      %p123 = por %p121, %p122
      %p124 = scmp.ne.s32.totalorder %s115, %s116
      %p125 = scmp.eq.s32.totalorder %s42, 0
      %p126 = por %p124, %p125
      %p127 = scmp.ne.s32.totalorder %s115, %s116
      %p128 = scmp.eq.s32.totalorder %s43, 1
      %p129 = por %p127, %p128
      %p131 = scmp.ne.s32.totalorder %s116, %s130
      %p132 = scmp.eq.s32.totalorder %s43, 0
      %p133 = por %p131, %p132
      %s135 = sadd.s32 %s134, 1
      %p138 = scmp.eq.s32.totalorder %s37, 1
      %p139 = scmp.ne.s32.totalorder %s134, %s136
      %p140 = scmp.eq.s32.totalorder %s37, 0
      %p141 = por %p139, %p140
      %p142 = scmp.ne.s32.totalorder %s134, %s136
      %p143 = scmp.eq.s32.totalorder %s42, 1
      %p144 = por %p142, %p143
      %p145 = scmp.ne.s32.totalorder %s136, %s137
      %p146 = scmp.eq.s32.totalorder %s42, 0
      %p147 = por %p145, %p146
      %p148 = scmp.ne.s32.totalorder %s136, %s137
      %p149 = scmp.eq.s32.totalorder %s43, 1
      %p150 = por %p148, %p149
      %p152 = scmp.ne.s32.totalorder %s137, %s151
      %p153 = scmp.eq.s32.totalorder %s43, 0
      %p154 = por %p152, %p153
      %s156 = sadd.s32 %s155, 1
      %p159 = scmp.eq.s32.totalorder %s37, 1
      %p160 = scmp.ne.s32.totalorder %s155, %s157
      %p161 = scmp.eq.s32.totalorder %s37, 0
      %p162 = por %p160, %p161
      %p163 = scmp.ne.s32.totalorder %s155, %s157
      %p164 = scmp.eq.s32.totalorder %s42, 1
      %p165 = por %p163, %p164
      %p166 = scmp.ne.s32.totalorder %s157, %s158
      %p167 = scmp.eq.s32.totalorder %s42, 0
      %p168 = por %p166, %p167
      %p169 = scmp.ne.s32.totalorder %s157, %s158
      %p170 = scmp.eq.s32.totalorder %s43, 1
      %p171 = por %p169, %p170
      %p173 = scmp.ne.s32.totalorder %s158, %s172
      %p174 = scmp.eq.s32.totalorder %s43, 0
      %p175 = por %p173, %p174
      %s177 = sadd.s32 %s176, 1
      %p180 = scmp.eq.s32.totalorder %s37, 1
      %p181 = scmp.ne.s32.totalorder %s176, %s178
      %p182 = scmp.eq.s32.totalorder %s37, 0
      %p183 = por %p181, %p182
      %p184 = scmp.ne.s32.totalorder %s176, %s178
      %p185 = scmp.eq.s32.totalorder %s42, 1
      %p186 = por %p184, %p185
      %p187 = scmp.ne.s32.totalorder %s178, %s179
      %p188 = scmp.eq.s32.totalorder %s42, 0
      %p189 = por %p187, %p188
      %p190 = scmp.ne.s32.totalorder %s178, %s179
      %p191 = scmp.eq.s32.totalorder %s43, 1
      %p192 = por %p190, %p191
      %p194 = scmp.ne.s32.totalorder %s179, %s193
      %p195 = scmp.eq.s32.totalorder %s43, 0
      %p196 = por %p194, %p195
      %s198 = sadd.s32 %s197, 1
      %p201 = scmp.eq.s32.totalorder %s37, 1
      %p202 = scmp.ne.s32.totalorder %s197, %s199
      %p203 = scmp.eq.s32.totalorder %s37, 0
      %p204 = por %p202, %p203
      %p205 = scmp.ne.s32.totalorder %s197, %s199
      %p206 = scmp.eq.s32.totalorder %s42, 1
      %p207 = por %p205, %p206
      %p208 = scmp.ne.s32.totalorder %s199, %s200
      %p209 = scmp.eq.s32.totalorder %s42, 0
      %p210 = por %p208, %p209
      %p211 = scmp.ne.s32.totalorder %s199, %s200
      %p212 = scmp.eq.s32.totalorder %s43, 1
      %p213 = por %p211, %p212
      %p215 = scmp.ne.s32.totalorder %s200, %s214
      %p216 = scmp.eq.s32.totalorder %s43, 0
      %p217 = por %p215, %p216
      %s219 = sadd.s32 %s218, 1
      %p222 = scmp.eq.s32.totalorder %s37, 1
      %p223 = scmp.ne.s32.totalorder %s218, %s220
      %p224 = scmp.eq.s32.totalorder %s37, 0
      %p225 = por %p223, %p224
      %p226 = scmp.ne.s32.totalorder %s218, %s220
      %p227 = scmp.eq.s32.totalorder %s42, 1
      %p228 = por %p226, %p227
      %p229 = scmp.ne.s32.totalorder %s220, %s221
      %p230 = scmp.eq.s32.totalorder %s42, 0
      %p231 = por %p229, %p230
      %p232 = scmp.ne.s32.totalorder %s220, %s221
      %p233 = scmp.eq.s32.totalorder %s43, 1
      %p234 = por %p232, %p233
      %p236 = scmp.ne.s32.totalorder %s221, %s235
      %p237 = scmp.eq.s32.totalorder %s43, 0
      %p238 = por %p236, %p237
      %s240 = sadd.s32 %s239, 1
      %p243 = scmp.eq.s32.totalorder %s37, 1
      %p244 = scmp.ne.s32.totalorder %s239, %s241
      %p245 = scmp.eq.s32.totalorder %s37, 0
      %p246 = por %p244, %p245
      %p247 = scmp.ne.s32.totalorder %s239, %s241
      %p248 = scmp.eq.s32.totalorder %s42, 1
      %p249 = por %p247, %p248
      %p250 = scmp.ne.s32.totalorder %s241, %s242
      %p251 = scmp.eq.s32.totalorder %s42, 0
      %p252 = por %p250, %p251
      %p253 = scmp.ne.s32.totalorder %s241, %s242
      %p254 = scmp.eq.s32.totalorder %s43, 1
      %p255 = por %p253, %p254
      %p257 = scmp.ne.s32.totalorder %s242, %s256
      %p258 = scmp.eq.s32.totalorder %s43, 0
      %p259 = por %p257, %p258
      %s261 = sadd.s32 %s260, 1
      %p264 = scmp.eq.s32.totalorder %s37, 1
      %p265 = scmp.ne.s32.totalorder %s260, %s262
      %p266 = scmp.eq.s32.totalorder %s37, 0
      %p267 = por %p265, %p266
      %p268 = scmp.ne.s32.totalorder %s260, %s262
      %p269 = scmp.eq.s32.totalorder %s42, 1
      %p270 = por %p268, %p269
      %p271 = scmp.ne.s32.totalorder %s262, %s263
      %p272 = scmp.eq.s32.totalorder %s42, 0
      %p273 = por %p271, %p272
      %p274 = scmp.ne.s32.totalorder %s262, %s263
      %p275 = scmp.eq.s32.totalorder %s43, 1
      %p276 = por %p274, %p275
      %p278 = scmp.ne.s32.totalorder %s263, %s277
      %p279 = scmp.eq.s32.totalorder %s43, 0
      %p280 = por %p278, %p279
      %s282 = sadd.s32 %s281, 1
      %p285 = scmp.eq.s32.totalorder %s37, 1
      %p286 = scmp.ne.s32.totalorder %s281, %s283
      %p287 = scmp.eq.s32.totalorder %s37, 0
      %p288 = por %p286, %p287
      %p289 = scmp.ne.s32.totalorder %s281, %s283
      %p290 = scmp.eq.s32.totalorder %s42, 1
      %p291 = por %p289, %p290
      %p292 = scmp.ne.s32.totalorder %s283, %s284
      %p293 = scmp.eq.s32.totalorder %s42, 0
      %p294 = por %p292, %p293
      %p295 = scmp.ne.s32.totalorder %s283, %s284
      %p296 = scmp.eq.s32.totalorder %s43, 1
      %p297 = por %p295, %p296
      %p299 = scmp.ne.s32.totalorder %s284, %s298
      %p300 = scmp.eq.s32.totalorder %s43, 0
      %p301 = por %p299, %p300
      %s303 = sadd.s32 %s302, 1
      %p306 = scmp.eq.s32.totalorder %s37, 1
      %p307 = scmp.ne.s32.totalorder %s302, %s304
      %p308 = scmp.eq.s32.totalorder %s37, 0
      %p309 = por %p307, %p308
      %p310 = scmp.ne.s32.totalorder %s302, %s304
      %p311 = scmp.eq.s32.totalorder %s42, 1
      %p312 = por %p310, %p311
      %p313 = scmp.ne.s32.totalorder %s304, %s305
      %p314 = scmp.eq.s32.totalorder %s42, 0
      %p315 = por %p313, %p314
      %p316 = scmp.ne.s32.totalorder %s304, %s305
      %p317 = scmp.eq.s32.totalorder %s43, 1
      %p318 = por %p316, %p317
      %p320 = scmp.ne.s32.totalorder %s305, %s319
      %p321 = scmp.eq.s32.totalorder %s43, 0
      %p322 = por %p320, %p321
      %s324 = sadd.s32 %s323, 1
      %p327 = scmp.eq.s32.totalorder %s37, 1
      %p328 = scmp.ne.s32.totalorder %s323, %s325
      %p329 = scmp.eq.s32.totalorder %s37, 0
      %p330 = por %p328, %p329
      %p331 = scmp.ne.s32.totalorder %s323, %s325
      %p332 = scmp.eq.s32.totalorder %s42, 1
      %p333 = por %p331, %p332
      %p334 = scmp.ne.s32.totalorder %s325, %s326
      %p335 = scmp.eq.s32.totalorder %s42, 0
      %p336 = por %p334, %p335
      %p337 = scmp.ne.s32.totalorder %s325, %s326
      %p338 = scmp.eq.s32.totalorder %s43, 1
      %p339 = por %p337, %p338
      %p341 = scmp.ne.s32.totalorder %s326, %s340
      %p342 = scmp.eq.s32.totalorder %s43, 0
      %p343 = por %p341, %p342
      %s345 = sadd.s32 %s344, 1
      %p348 = scmp.eq.s32.totalorder %s37, 1
      %p349 = scmp.ne.s32.totalorder %s344, %s346
      %p350 = scmp.eq.s32.totalorder %s37, 0
      %p351 = por %p349, %p350
      %p352 = scmp.ne.s32.totalorder %s344, %s346
      %p353 = scmp.eq.s32.totalorder %s42, 1
      %p354 = por %p352, %p353
      %p355 = scmp.ne.s32.totalorder %s346, %s347
      %p356 = scmp.eq.s32.totalorder %s42, 0
      %p357 = por %p355, %p356
      %p358 = scmp.ne.s32.totalorder %s346, %s347
      %p359 = scmp.eq.s32.totalorder %s43, 1
      %p360 = por %p358, %p359
      %p362 = scmp.ne.s32.totalorder %s347, %s361
      %p363 = scmp.eq.s32.totalorder %s43, 0
      %p364 = por %p362, %p363
      %s366 = sadd.s32 %s365, 1
      %p369 = scmp.eq.s32.totalorder %s37, 1
      %p370 = scmp.ne.s32.totalorder %s365, %s367
      %p371 = scmp.eq.s32.totalorder %s37, 0
      %p372 = por %p370, %p371
      %p373 = scmp.ne.s32.totalorder %s365, %s367
      %p374 = scmp.eq.s32.totalorder %s42, 1
      %p375 = por %p373, %p374
      %p376 = scmp.ne.s32.totalorder %s367, %s368
      %p377 = scmp.eq.s32.totalorder %s42, 0
      %p378 = por %p376, %p377
      %p379 = scmp.ne.s32.totalorder %s367, %s368
      %p380 = scmp.eq.s32.totalorder %s43, 1
      %p381 = por %p379, %p380
      %p383 = scmp.ne.s32.totalorder %s368, %s382
      %p384 = scmp.eq.s32.totalorder %s43, 0
      %p385 = por %p383, %p384
      %s387 = sadd.s32 %s386, 1
      %p390 = scmp.eq.s32.totalorder %s37, 1
      %p391 = scmp.ne.s32.totalorder %s386, %s388
      %p392 = scmp.eq.s32.totalorder %s37, 0
      %p393 = por %p391, %p392
      %p394 = scmp.ne.s32.totalorder %s386, %s388
      %p395 = scmp.eq.s32.totalorder %s42, 1
      %p396 = por %p394, %p395
      %p397 = scmp.ne.s32.totalorder %s388, %s389
      %p398 = scmp.eq.s32.totalorder %s42, 0
      %p399 = por %p397, %p398
      %p400 = scmp.ne.s32.totalorder %s388, %s389
      %p401 = scmp.eq.s32.totalorder %s43, 1
      %p402 = por %p400, %p401
      %p404 = scmp.ne.s32.totalorder %s389, %s403
      %p405 = scmp.eq.s32.totalorder %s43, 0
      %p406 = por %p404, %p405
      %s408 = sadd.s32 %s407, 1
      %p411 = scmp.eq.s32.totalorder %s37, 1
      %p412 = scmp.ne.s32.totalorder %s407, %s409
      %p413 = scmp.eq.s32.totalorder %s37, 0
      %p414 = por %p412, %p413
      %p415 = scmp.ne.s32.totalorder %s407, %s409
      %p416 = scmp.eq.s32.totalorder %s42, 1
      %p417 = por %p415, %p416
      %p418 = scmp.ne.s32.totalorder %s409, %s410
      %p419 = scmp.eq.s32.totalorder %s42, 0
      %p420 = por %p418, %p419
      %p421 = scmp.ne.s32.totalorder %s409, %s410
      %p422 = scmp.eq.s32.totalorder %s43, 1
      %p423 = por %p421, %p422
      %p425 = scmp.ne.s32.totalorder %s410, %s424
      %p426 = scmp.eq.s32.totalorder %s43, 0
      %p427 = por %p425, %p426
      %s429 = sadd.s32 %s428, 1
      %p432 = scmp.eq.s32.totalorder %s37, 1
      %p433 = scmp.ne.s32.totalorder %s428, %s430
      %p434 = scmp.eq.s32.totalorder %s37, 0
      %p435 = por %p433, %p434
      %p436 = scmp.ne.s32.totalorder %s428, %s430
      %p437 = scmp.eq.s32.totalorder %s42, 1
      %p438 = por %p436, %p437
      %p439 = scmp.ne.s32.totalorder %s430, %s431
      %p440 = scmp.eq.s32.totalorder %s42, 0
      %p441 = por %p439, %p440
      %p442 = scmp.ne.s32.totalorder %s430, %s431
      %p443 = scmp.eq.s32.totalorder %s43, 1
      %p444 = por %p442, %p443
      %p446 = scmp.ne.s32.totalorder %s431, %s445
      %p447 = scmp.eq.s32.totalorder %s43, 0
      %p448 = por %p446, %p447
      %s450 = sadd.s32 %s449, 1
      %p453 = scmp.eq.s32.totalorder %s37, 1
      %p454 = scmp.ne.s32.totalorder %s449, %s451
      %p455 = scmp.eq.s32.totalorder %s37, 0
      %p456 = por %p454, %p455
      %p457 = scmp.ne.s32.totalorder %s449, %s451
      %p458 = scmp.eq.s32.totalorder %s42, 1
      %p459 = por %p457, %p458
      %p460 = scmp.ne.s32.totalorder %s451, %s452
      %p461 = scmp.eq.s32.totalorder %s42, 0
      %p462 = por %p460, %p461
      %p463 = scmp.ne.s32.totalorder %s451, %s452
      %p464 = scmp.eq.s32.totalorder %s43, 1
      %p465 = por %p463, %p464
      %p467 = scmp.ne.s32.totalorder %s452, %s466
      %p468 = scmp.eq.s32.totalorder %s43, 0
      %p469 = por %p467, %p468
      %s471 = sadd.s32 %s470, 1
      %p474 = scmp.eq.s32.totalorder %s37, 1
      %p475 = scmp.ne.s32.totalorder %s470, %s472
      %p476 = scmp.eq.s32.totalorder %s37, 0
      %p477 = por %p475, %p476
      %p478 = scmp.ne.s32.totalorder %s470, %s472
      %p479 = scmp.eq.s32.totalorder %s42, 1
      %p480 = por %p478, %p479
      %p481 = scmp.ne.s32.totalorder %s472, %s473
      %p482 = scmp.eq.s32.totalorder %s42, 0
      %p483 = por %p481, %p482
      %p484 = scmp.ne.s32.totalorder %s472, %s473
      %p485 = scmp.eq.s32.totalorder %s43, 1
      %p486 = por %p484, %p485
      %p488 = scmp.ne.s32.totalorder %s473, %s487
      %p489 = scmp.eq.s32.totalorder %s43, 0
      %p490 = por %p488, %p489
      %s491 = ssub.s32 %s37, %s44
      %p492 = scmp.eq.s32.totalorder %s491, 0
      %s494 = sadd.s32 %s493, 1
      %s495 = scalar_select %p492, %s493, %s494
      %p498 = pneg %p492
      %p499 = scmp.eq.s32.totalorder %s37, 1
      %p500 = por %p498, %p499
      %p501 = scmp.ne.s32.totalorder %s493, %s496
      %p502 = scmp.eq.s32.totalorder %s37, 0
      %p503 = por %p501, %p502
      %p504 = scmp.ne.s32.totalorder %s493, %s496
      %p505 = scmp.eq.s32.totalorder %s42, 1
      %p506 = por %p504, %p505
      %p507 = scmp.ne.s32.totalorder %s496, %s497
      %p508 = scmp.eq.s32.totalorder %s42, 0
      %p509 = por %p507, %p508
      %p510 = scmp.ne.s32.totalorder %s496, %s497
      %p511 = scmp.eq.s32.totalorder %s43, 1
      %p512 = por %p510, %p511
      %p514 = scmp.ne.s32.totalorder %s497, %s513
      %p515 = scmp.eq.s32.totalorder %s43, 0
      %p516 = por %p514, %p515
      %p517 = scmp.le.s32.totalorder 1, %s37
      %p518 = scmp.lt.s32.totalorder %s37, 3
      %p519 = pnand %p517, %p518
      %p520 = pneg %p519
      // Predicated region
      $region9: #{tpu_custom_call.1} parent=5 // pred_check
        _
      $region10: #{tpu_custom_call.1} parent=5 // pred_check_branch
        %522 = sbr.rel (%p519) target = $region12
      $region11: #{tpu_custom_call.1} parent=5 // pred_region
        %s523 = ssub.s32 %s37, 1
        // Predicated region
        $region13: #{tpu_custom_call.1} parent=11 // pred_check
          %p524 = pneg %p84
        $region14: #{tpu_custom_call.1} parent=11 // pred_check_branch
          %526 = sbr.rel (%p524) target = $region16
        $region15: #{tpu_custom_call.1} parent=11 // pred_region
          %528 = vsyncadd [#allocation6], 0
          %s529 = sshll.u32 %s1, 4
          %s530 = int_to_ptr.hbm [resolvable:$true] %s529
          %s531 = sshll.u32 [#allocation5], 4
          %s532 = int_to_ptr.vmem [resolvable:$true] %s531
          %537 = dma.hbm_to_vmem [thread:$0]  %s530, 1024, %s532, [#allocation6], 64, 64, 4
        $region16: #{tpu_custom_call.1} parent=11 // pred_fallthru
          _
        // Predicated region
        $region17: #{tpu_custom_call.1} parent=11 // pred_check
          %p538 = pneg %p105
        $region18: #{tpu_custom_call.1} parent=11 // pred_check_branch
          %540 = sbr.rel (%p538) target = $region20
        $region19: #{tpu_custom_call.1} parent=11 // pred_region
          _
        $region20: #{tpu_custom_call.1} parent=11 // pred_fallthru
          _
        // Predicated region
        $region21: #{tpu_custom_call.1} parent=11 // pred_check
          %p541 = pneg %p126
        $region22: #{tpu_custom_call.1} parent=11 // pred_check_branch
          %543 = sbr.rel (%p541) target = $region24
        $region23: #{tpu_custom_call.1} parent=11 // pred_region
          %545 = vsyncadd [#allocation6], 0
          %s547 = sshll.u32 %s3, 4
          %s548 = int_to_ptr.hbm [resolvable:$true] %s547
          %s549 = sshll.u32 [#allocation7], 4
          %s550 = int_to_ptr.vmem [resolvable:$true] %s549
          %552 = dma.hbm_to_vmem [thread:$0]  %s548, 16, %s550, [#allocation6]
        $region24: #{tpu_custom_call.1} parent=11 // pred_fallthru
          _
        // Predicated region
        $region25: #{tpu_custom_call.1} parent=11 // pred_check
          %p553 = pneg %p147
        $region26: #{tpu_custom_call.1} parent=11 // pred_check_branch
          %555 = sbr.rel (%p553) target = $region28
        $region27: #{tpu_custom_call.1} parent=11 // pred_region
          %557 = vsyncadd [#allocation9], 0
          %s558 = sshll.u32 %s4, 4
          %s559 = int_to_ptr.hbm [resolvable:$true] %s558
          %s560 = sshll.u32 [#allocation8], 4
          %s561 = int_to_ptr.vmem [resolvable:$true] %s560
          %566 = dma.hbm_to_vmem [thread:$0]  %s559, 1024, %s561, [#allocation9], 64, 64, 4
        $region28: #{tpu_custom_call.1} parent=11 // pred_fallthru
          _
        // Predicated region
        $region29: #{tpu_custom_call.1} parent=11 // pred_check
          %p567 = pneg %p168
        $region30: #{tpu_custom_call.1} parent=11 // pred_check_branch
          %569 = sbr.rel (%p567) target = $region32
        $region31: #{tpu_custom_call.1} parent=11 // pred_region
          _
        $region32: #{tpu_custom_call.1} parent=11 // pred_fallthru
          _
        // Predicated region
        $region33: #{tpu_custom_call.1} parent=11 // pred_check
          %p570 = pneg %p189
        $region34: #{tpu_custom_call.1} parent=11 // pred_check_branch
          %572 = sbr.rel (%p570) target = $region36
        $region35: #{tpu_custom_call.1} parent=11 // pred_region
          _
        $region36: #{tpu_custom_call.1} parent=11 // pred_fallthru
          _
        // Predicated region
        $region37: #{tpu_custom_call.1} parent=11 // pred_check
          %p573 = pneg %p210
        $region38: #{tpu_custom_call.1} parent=11 // pred_check_branch
          %575 = sbr.rel (%p573) target = $region40
        $region39: #{tpu_custom_call.1} parent=11 // pred_region
          %577 = vsyncadd [#allocation9], 0
          %s578 = sshll.u32 %s7, 4
          %s579 = int_to_ptr.hbm [resolvable:$true] %s578
          %s580 = sshll.u32 [#allocation10], 4
          %s581 = int_to_ptr.vmem [resolvable:$true] %s580
          %586 = dma.hbm_to_vmem [thread:$0]  %s579, 1024, %s581, [#allocation9], 64, 64, 4
        $region40: #{tpu_custom_call.1} parent=11 // pred_fallthru
          _
        // Predicated region
        $region41: #{tpu_custom_call.1} parent=11 // pred_check
          %p587 = pneg %p231
        $region42: #{tpu_custom_call.1} parent=11 // pred_check_branch
          %589 = sbr.rel (%p587) target = $region44
        $region43: #{tpu_custom_call.1} parent=11 // pred_region
          _
        $region44: #{tpu_custom_call.1} parent=11 // pred_fallthru
          _
        // Predicated region
        $region45: #{tpu_custom_call.1} parent=11 // pred_check
          %p590 = pneg %p252
        $region46: #{tpu_custom_call.1} parent=11 // pred_check_branch
          %592 = sbr.rel (%p590) target = $region48
        $region47: #{tpu_custom_call.1} parent=11 // pred_region
          _
        $region48: #{tpu_custom_call.1} parent=11 // pred_fallthru
          _
        // Predicated region
        $region49: #{tpu_custom_call.1} parent=11 // pred_check
          %p593 = pneg %p273
        $region50: #{tpu_custom_call.1} parent=11 // pred_check_branch
          %595 = sbr.rel (%p593) target = $region52
        $region51: #{tpu_custom_call.1} parent=11 // pred_region
          %597 = vsyncadd [#allocation12], 0
          %s598 = sshll.u32 %s10, 4
          %s599 = int_to_ptr.hbm [resolvable:$true] %s598
          %s600 = sshll.u32 [#allocation11], 4
          %s601 = int_to_ptr.vmem [resolvable:$true] %s600
          %606 = dma.hbm_to_vmem [thread:$0]  %s599, 1024, %s601, [#allocation12], 64, 64, 4
        $region52: #{tpu_custom_call.1} parent=11 // pred_fallthru
          _
        // Predicated region
        $region53: #{tpu_custom_call.1} parent=11 // pred_check
          %p607 = pneg %p294
        $region54: #{tpu_custom_call.1} parent=11 // pred_check_branch
          %609 = sbr.rel (%p607) target = $region56
        $region55: #{tpu_custom_call.1} parent=11 // pred_region
          _
        $region56: #{tpu_custom_call.1} parent=11 // pred_fallthru
          _
        // Predicated region
        $region57: #{tpu_custom_call.1} parent=11 // pred_check
          %p610 = pneg %p315
        $region58: #{tpu_custom_call.1} parent=11 // pred_check_branch
          %612 = sbr.rel (%p610) target = $region60
        $region59: #{tpu_custom_call.1} parent=11 // pred_region
          _
        $region60: #{tpu_custom_call.1} parent=11 // pred_fallthru
          _
        // Predicated region
        $region61: #{tpu_custom_call.1} parent=11 // pred_check
          %p613 = pneg %p336
        $region62: #{tpu_custom_call.1} parent=11 // pred_check_branch
          %615 = sbr.rel (%p613) target = $region64
        $region63: #{tpu_custom_call.1} parent=11 // pred_region
          %617 = vsyncadd [#allocation12], 0
          %s618 = sshll.u32 %s13, 4
          %s619 = int_to_ptr.hbm [resolvable:$true] %s618
          %s620 = sshll.u32 [#allocation13], 4
          %s621 = int_to_ptr.vmem [resolvable:$true] %s620
          %626 = dma.hbm_to_vmem [thread:$0]  %s619, 1024, %s621, [#allocation12], 64, 64, 4
        $region64: #{tpu_custom_call.1} parent=11 // pred_fallthru
          _
        // Predicated region
        $region65: #{tpu_custom_call.1} parent=11 // pred_check
          %p627 = pneg %p357
        $region66: #{tpu_custom_call.1} parent=11 // pred_check_branch
          %629 = sbr.rel (%p627) target = $region68
        $region67: #{tpu_custom_call.1} parent=11 // pred_region
          _
        $region68: #{tpu_custom_call.1} parent=11 // pred_fallthru
          _
        // Predicated region
        $region69: #{tpu_custom_call.1} parent=11 // pred_check
          %p630 = pneg %p378
        $region70: #{tpu_custom_call.1} parent=11 // pred_check_branch
          %632 = sbr.rel (%p630) target = $region72
        $region71: #{tpu_custom_call.1} parent=11 // pred_region
          _
        $region72: #{tpu_custom_call.1} parent=11 // pred_fallthru
          _
        // Predicated region
        $region73: #{tpu_custom_call.1} parent=11 // pred_check
          %p633 = pneg %p399
        $region74: #{tpu_custom_call.1} parent=11 // pred_check_branch
          %635 = sbr.rel (%p633) target = $region76
        $region75: #{tpu_custom_call.1} parent=11 // pred_region
          %637 = vsyncadd [#allocation15], 0
          %s638 = sshll.u32 %s16, 4
          %s639 = int_to_ptr.hbm [resolvable:$true] %s638
          %s640 = sshll.u32 [#allocation14], 4
          %s641 = int_to_ptr.vmem [resolvable:$true] %s640
          %646 = dma.hbm_to_vmem [thread:$0]  %s639, 1024, %s641, [#allocation15], 64, 64, 4
        $region76: #{tpu_custom_call.1} parent=11 // pred_fallthru
          _
        // Predicated region
        $region77: #{tpu_custom_call.1} parent=11 // pred_check
          %p647 = pneg %p420
        $region78: #{tpu_custom_call.1} parent=11 // pred_check_branch
          %649 = sbr.rel (%p647) target = $region80
        $region79: #{tpu_custom_call.1} parent=11 // pred_region
          _
        $region80: #{tpu_custom_call.1} parent=11 // pred_fallthru
          _
        // Predicated region
        $region81: #{tpu_custom_call.1} parent=11 // pred_check
          %p650 = pneg %p441
        $region82: #{tpu_custom_call.1} parent=11 // pred_check_branch
          %652 = sbr.rel (%p650) target = $region84
        $region83: #{tpu_custom_call.1} parent=11 // pred_region
          _
        $region84: #{tpu_custom_call.1} parent=11 // pred_fallthru
          _
        // Predicated region
        $region85: #{tpu_custom_call.1} parent=11 // pred_check
          %p653 = pneg %p462
        $region86: #{tpu_custom_call.1} parent=11 // pred_check_branch
          %655 = sbr.rel (%p653) target = $region88
        $region87: #{tpu_custom_call.1} parent=11 // pred_region
          %657 = vsyncadd [#allocation15], 0
          %s658 = sshll.u32 %s19, 4
          %s659 = int_to_ptr.hbm [resolvable:$true] %s658
          %s660 = sshll.u32 [#allocation16], 4
          %s661 = int_to_ptr.vmem [resolvable:$true] %s660
          %666 = dma.hbm_to_vmem [thread:$0]  %s659, 2048, %s661, [#allocation15], 128, 128, 8
        $region88: #{tpu_custom_call.1} parent=11 // pred_fallthru
          _
        // Predicated region
        $region89: #{tpu_custom_call.1} parent=11 // pred_check
          %p667 = pneg %p483
        $region90: #{tpu_custom_call.1} parent=11 // pred_check_branch
          %669 = sbr.rel (%p667) target = $region92
        $region91: #{tpu_custom_call.1} parent=11 // pred_region
          _
        $region92: #{tpu_custom_call.1} parent=11 // pred_fallthru
          _
      $region12: #{tpu_custom_call.1} parent=5 // pred_fallthru
        _
      %p670 = scmp.lt.s32.totalorder %s37, 2
      // Predicated region
      $region93: #{tpu_custom_call.1} parent=5 // pred_check
        %p671 = pneg %p670
      $region94: #{tpu_custom_call.1} parent=5 // pred_check_branch
        %673 = sbr.rel (%p671) target = $region96
      $region95: #{tpu_custom_call.1} parent=5 // pred_region
        // Predicated region
        $region97: #{tpu_custom_call.1} parent=95 // pred_check
          %p674 = pneg %p57
        $region98: #{tpu_custom_call.1} parent=95 // pred_check_branch
          %676 = sbr.rel (%p674) target = $region100
        $region99: #{tpu_custom_call.1} parent=95 // pred_region
          %s677 = sand.u32 %s47, 1
          %s678 = scalar_lea.sflag [#allocation3], %s677
          %s679 = sand.u32 %s47, 1
          %s680 = smul.addr %s679, 4
          %s681 = scalar_lea.vmem [#allocation2], %s680
          %683 = vsyncadd %s678, 0
          %s684 = smul.addr %s37, 4
          %s685 = scalar_lea.hbm %s0, %s684
          %s687 = sshll.u32 %s685, 4
          %s688 = int_to_ptr.hbm [resolvable:$true] %s687
          %s689 = sshll.u32 %s681, 4
          %s690 = int_to_ptr.vmem [resolvable:$true] %s689
          %692 = dma.hbm_to_vmem [thread:$0]  %s688, 64, %s690, %s678
        $region100: #{tpu_custom_call.1} parent=95 // pred_fallthru
          _
      $region96: #{tpu_custom_call.1} parent=5 // pred_fallthru
        _
      %p693 = scmp.le.s32.totalorder 1, %s37
      %p694 = scmp.lt.s32.totalorder %s37, 3
      %p695 = pnand %p693, %p694
      %p696 = pneg %p695
      // Predicated region
      $region101: #{tpu_custom_call.1} parent=5 // pred_check
        _
      $region102: #{tpu_custom_call.1} parent=5 // pred_check_branch
        %698 = sbr.rel (%p695) target = $region104
      $region103: #{tpu_custom_call.1} parent=5 // pred_region
        %s699 = ssub.s32 %s37, 1
        %s700 = sand.u32 %s50, 1
        %s701 = scalar_lea.sflag [#allocation3], %s700
        %s702 = sand.u32 %s50, 1
        %s703 = smul.addr %s702, 4
        %s704 = scalar_lea.vmem [#allocation2], %s703
        // Predicated region
        $region105: #{tpu_custom_call.1} parent=103 // pred_check
          %p705 = pneg %p63
        $region106: #{tpu_custom_call.1} parent=103 // pred_check_branch
          %707 = sbr.rel (%p705) target = $region108
        $region107: #{tpu_custom_call.1} parent=103 // pred_region
          %709 = dma.done %s701, 64
        $region108: #{tpu_custom_call.1} parent=103 // pred_fallthru
          _
        // Predicated region
        $region109: #{tpu_custom_call.1} parent=103 // pred_check
          %p710 = pneg %p84
        $region110: #{tpu_custom_call.1} parent=103 // pred_check_branch
          %712 = sbr.rel (%p710) target = $region112
        $region111: #{tpu_custom_call.1} parent=103 // pred_region
          %714 = dma.done [#allocation6], 1024
        $region112: #{tpu_custom_call.1} parent=103 // pred_fallthru
          _
        // Predicated region
        $region113: #{tpu_custom_call.1} parent=103 // pred_check
          %p715 = pneg %p126
        $region114: #{tpu_custom_call.1} parent=103 // pred_check_branch
          %717 = sbr.rel (%p715) target = $region116
        $region115: #{tpu_custom_call.1} parent=103 // pred_region
          %719 = dma.done [#allocation6], 16
        $region116: #{tpu_custom_call.1} parent=103 // pred_fallthru
          _
        // Predicated region
        $region117: #{tpu_custom_call.1} parent=103 // pred_check
          %p720 = pneg %p147
        $region118: #{tpu_custom_call.1} parent=103 // pred_check_branch
          %722 = sbr.rel (%p720) target = $region120
        $region119: #{tpu_custom_call.1} parent=103 // pred_region
          %724 = dma.done [#allocation9], 1024
        $region120: #{tpu_custom_call.1} parent=103 // pred_fallthru
          _
        // Predicated region
        $region121: #{tpu_custom_call.1} parent=103 // pred_check
          %p725 = pneg %p210
        $region122: #{tpu_custom_call.1} parent=103 // pred_check_branch
          %727 = sbr.rel (%p725) target = $region124
        $region123: #{tpu_custom_call.1} parent=103 // pred_region
          %729 = dma.done [#allocation9], 1024
        $region124: #{tpu_custom_call.1} parent=103 // pred_fallthru
          _
        // Predicated region
        $region125: #{tpu_custom_call.1} parent=103 // pred_check
          %p730 = pneg %p273
        $region126: #{tpu_custom_call.1} parent=103 // pred_check_branch
          %732 = sbr.rel (%p730) target = $region128
        $region127: #{tpu_custom_call.1} parent=103 // pred_region
          %734 = dma.done [#allocation12], 1024
        $region128: #{tpu_custom_call.1} parent=103 // pred_fallthru
          _
        // Predicated region
        $region129: #{tpu_custom_call.1} parent=103 // pred_check
          %p735 = pneg %p336
        $region130: #{tpu_custom_call.1} parent=103 // pred_check_branch
          %737 = sbr.rel (%p735) target = $region132
        $region131: #{tpu_custom_call.1} parent=103 // pred_region
          %739 = dma.done [#allocation12], 1024
        $region132: #{tpu_custom_call.1} parent=103 // pred_fallthru
          _
        // Predicated region
        $region133: #{tpu_custom_call.1} parent=103 // pred_check
          %p740 = pneg %p399
        $region134: #{tpu_custom_call.1} parent=103 // pred_check_branch
          %742 = sbr.rel (%p740) target = $region136
        $region135: #{tpu_custom_call.1} parent=103 // pred_region
          %744 = dma.done [#allocation15], 1024
        $region136: #{tpu_custom_call.1} parent=103 // pred_fallthru
          _
        // Predicated region
        $region137: #{tpu_custom_call.1} parent=103 // pred_check
          %p745 = pneg %p462
        $region138: #{tpu_custom_call.1} parent=103 // pred_check_branch
          %747 = sbr.rel (%p745) target = $region140
        $region139: #{tpu_custom_call.1} parent=103 // pred_region
          %749 = dma.done [#allocation15], 2048
        $region140: #{tpu_custom_call.1} parent=103 // pred_fallthru
          _
        %s750 = sand.u32 %s50, 1
        %s751 = scalar_lea.sflag [#allocation3], %s750
        %s752 = sand.u32 %s50, 1
        %s753 = smul.addr %s752, 4
        %s754 = scalar_lea.vmem [#allocation2], %s753
        %p755 = pneg %p63
        %p756 = pneg %p60
        %p757 = pneg %p84
        %p758 = pneg %p81
        %p759 = pneg %p105
        %p760 = pneg %p102
        %p761 = pneg %p126
        %p762 = pneg %p123
        %p763 = pneg %p147
        %p764 = pneg %p144
        %p765 = pneg %p168
        %p766 = pneg %p165
        %p767 = pneg %p189
        %p768 = pneg %p186
        %p769 = pneg %p210
        %p770 = pneg %p207
        %p771 = pneg %p231
        %p772 = pneg %p228
        %p773 = pneg %p252
        %p774 = pneg %p249
        %p775 = pneg %p273
        %p776 = pneg %p270
        %p777 = pneg %p294
        %p778 = pneg %p291
        %p779 = pneg %p315
        %p780 = pneg %p312
        %p781 = pneg %p336
        %p782 = pneg %p333
        %p783 = pneg %p357
        %p784 = pneg %p354
        %p785 = pneg %p378
        %p786 = pneg %p375
        %p787 = pneg %p399
        %p788 = pneg %p396
        %p789 = pneg %p420
        %p790 = pneg %p417
        %p791 = pneg %p441
        %p792 = pneg %p438
        %p793 = pneg %p462
        %p794 = pneg %p459
        %p795 = pneg %p483
        %p796 = pneg %p480
        %p797 = pneg %p509
        %p798 = pneg %p506
        %s799 = sand.u32 %s496, 1
        %s800 = scalar_lea.sflag [#allocation4], %s799
        %s801 = sand.u32 %s496, 1
        %s802 = smul.addr %s801, 16
        %s803 = scalar_lea.vmem [#allocation17], %s802
        %v804 = vld [vmem:[%s704] sm:$0xf]
        %v805 = vld [vmem:[#allocation5] sm:$0xf]
        %v806 = vld [vmem:[#allocation5 + $0x4] sm:$0xf]
        %v807 = vld [vmem:[#allocation5 + $0x8] sm:$0xf]
        %v808 = vld [vmem:[#allocation5 + $0xc] sm:$0xf]
        %v809 = vld [vmem:[#allocation5 + $0x10] sm:$0xf]
        %v810 = vld [vmem:[#allocation5 + $0x14] sm:$0xf]
        %v811 = vld [vmem:[#allocation5 + $0x18] sm:$0xf]
        %v812 = vld [vmem:[#allocation5 + $0x1c] sm:$0xf]
        %v813 = vld [vmem:[#allocation5 + $0x20] sm:$0xf]
        %v814 = vld [vmem:[#allocation5 + $0x24] sm:$0xf]
        %v815 = vld [vmem:[#allocation5 + $0x28] sm:$0xf]
        %v816 = vld [vmem:[#allocation5 + $0x2c] sm:$0xf]
        %v817 = vld [vmem:[#allocation5 + $0x30] sm:$0xf]
        %v818 = vld [vmem:[#allocation5 + $0x34] sm:$0xf]
        %v819 = vld [vmem:[#allocation5 + $0x38] sm:$0xf]
        %v820 = vld [vmem:[#allocation5 + $0x3c] sm:$0xf]
        %v821 = vld [vmem:[%s2] sm:$0x1]
        %v822 = vld [vmem:[#allocation7] sm:$0x1]
        %v839 = vunpack.c.l.b16 %v805
        %v840 = vunpack.c.l.b16 %v806
        %v841 = vunpack.c.l.b16 %v807
        %v842 = vunpack.c.l.b16 %v808
        %v843 = vunpack.c.l.b16 %v809
        %v844 = vunpack.c.l.b16 %v810
        %v845 = vunpack.c.l.b16 %v811
        %v846 = vunpack.c.l.b16 %v812
        %v847 = vunpack.c.l.b16 %v813
        %v848 = vunpack.c.l.b16 %v814
        %v849 = vunpack.c.l.b16 %v815
        %v850 = vunpack.c.l.b16 %v816
        %v851 = vunpack.c.l.b16 %v817
        %v852 = vunpack.c.l.b16 %v818
        %v853 = vunpack.c.l.b16 %v819
        %v854 = vunpack.c.l.b16 %v820
        %v855 = vpack.c.b16 %v840, %v839
        %v856 = vpack.c.b16 %v842, %v841
        %v857 = vpack.c.b16 %v844, %v843
        %v858 = vpack.c.b16 %v846, %v845
        %v859 = vpack.c.b16 %v848, %v847
        %v860 = vpack.c.b16 %v850, %v849
        %v861 = vpack.c.b16 %v852, %v851
        %v862 = vpack.c.b16 %v854, %v853
        %871 = vmatpush.bf16.msra.mxu0 %v862
        %872 = vmatpush.bf16.msra.mxu0 %v861
        %873 = vmatpush.bf16.msra.mxu0 %v860
        %874 = vmatpush.bf16.msra.mxu0 %v859
        %875 = vmatpush.bf16.msra.mxu0 %v858
        %876 = vmatpush.bf16.msra.mxu0 %v857
        %877 = vmatpush.bf16.msra.mxu0 %v856
        %878 = vmatpush.bf16.msra.mxu0 %v855
        %879 = vmatmul.bf16.gmra.mxu0 %v804
        %v880 = vpop.f32.mrf.mxu0
        %v881 = vadd.f32 0.0, %v880
        %v882 = vpop.f32.mrf.mxu0
        %883 = vdwg.mxu0
        %v884 = vrot.slane %v881, 4
        %v885 = vadd.f32 %v881, %v884
        %v886 = vrot.slane %v885, 2
        %v887 = vadd.f32 %v885, %v886
        %v888 = vrot.slane %v887, 1
        %v889 = vadd.f32 %v887, %v888
        %v890 = vmul.f32 %v881, %v881
        %v891 = vrot.slane %v890, 4
        %v892 = vadd.f32 %v890, %v891
        %v893 = vrot.slane %v892, 2
        %v894 = vadd.f32 %v892, %v893
        %v895 = vrot.slane %v894, 1
        %v896 = vadd.f32 %v894, %v895
        %v897 = vmul.f32 %v889, 0.125
        %v898 = vmul.f32 %v896, 0.125
        %v899 = vmul.f32 %v897, %v897
        %v900 = vsub.f32 %v898, %v899
        %v901 = vmax.f32 %v900, 0.0
        %v902 = vadd.f32 %v901, 0.8
        %v903 = vrsqrt.pop %v902
        %v904 = vmul.f32 %v903, %v902
        %v905 = vmul.f32 %v904, %v903
        %v906 = vmul.f32 0.5, %v905
        %v907 = vsub.f32 1.5, %v906
        %v908 = vmul.f32 %v903, %v907
        %vm909 = vweird.f32 %v902
        %vm910 = vweird.f32 %v903
        %vm911 = vmor %vm909, %vm910
        %v912 = vsel %vm911, %v903, %v908
        %v913 = vmul.f32 %v821, %v912
        %v914 = vmul.f32 %v897, %v913
        %v915 = vsub.f32 %v822, %v914
        %v917 = vperm.slane %v913, 0
        %v919 = vmul.f32 %v881, %v917
        %v921 = vperm.slane %v915, 0
        %v923 = vadd.f32 %v919, %v921
        %vm924 = vcmp.gt.f32.partialorder %v923, 0.0
        %v925 = vmul.f32 %v923, 0.2
        %v926 = vsel %vm924, %v923, %v925
        %v927 = vpack.c.bf16 %v926, %v926
        %v928 = vld [vmem:[#allocation8] sm:$0xf]
        %v929 = vld [vmem:[#allocation8 + $0x4] sm:$0xf]
        %v930 = vld [vmem:[#allocation8 + $0x8] sm:$0xf]
        %v931 = vld [vmem:[#allocation8 + $0xc] sm:$0xf]
        %v932 = vld [vmem:[#allocation8 + $0x10] sm:$0xf]
        %v933 = vld [vmem:[#allocation8 + $0x14] sm:$0xf]
        %v934 = vld [vmem:[#allocation8 + $0x18] sm:$0xf]
        %v935 = vld [vmem:[#allocation8 + $0x1c] sm:$0xf]
        %v936 = vld [vmem:[#allocation8 + $0x20] sm:$0xf]
        %v937 = vld [vmem:[#allocation8 + $0x24] sm:$0xf]
        %v938 = vld [vmem:[#allocation8 + $0x28] sm:$0xf]
        %v939 = vld [vmem:[#allocation8 + $0x2c] sm:$0xf]
        %v940 = vld [vmem:[#allocation8 + $0x30] sm:$0xf]
        %v941 = vld [vmem:[#allocation8 + $0x34] sm:$0xf]
        %v942 = vld [vmem:[#allocation8 + $0x38] sm:$0xf]
        %v943 = vld [vmem:[#allocation8 + $0x3c] sm:$0xf]
        %v944 = vld [vmem:[%s5] sm:$0x1]
        %v945 = vld [vmem:[%s6] sm:$0x1]
        %v962 = vunpack.c.l.b16 %v928
        %v963 = vunpack.c.l.b16 %v929
        %v964 = vunpack.c.l.b16 %v930
        %v965 = vunpack.c.l.b16 %v931
        %v966 = vunpack.c.l.b16 %v932
        %v967 = vunpack.c.l.b16 %v933
        %v968 = vunpack.c.l.b16 %v934
        %v969 = vunpack.c.l.b16 %v935
        %v970 = vunpack.c.l.b16 %v936
        %v971 = vunpack.c.l.b16 %v937
        %v972 = vunpack.c.l.b16 %v938
        %v973 = vunpack.c.l.b16 %v939
        %v974 = vunpack.c.l.b16 %v940
        %v975 = vunpack.c.l.b16 %v941
        %v976 = vunpack.c.l.b16 %v942
        %v977 = vunpack.c.l.b16 %v943
        %v978 = vpack.c.b16 %v963, %v962
        %v979 = vpack.c.b16 %v965, %v964
        %v980 = vpack.c.b16 %v967, %v966
        %v981 = vpack.c.b16 %v969, %v968
        %v982 = vpack.c.b16 %v971, %v970
        %v983 = vpack.c.b16 %v973, %v972
        %v984 = vpack.c.b16 %v975, %v974
        %v985 = vpack.c.b16 %v977, %v976
        %994 = vmatpush.bf16.msra.mxu0 %v985
        %995 = vmatpush.bf16.msra.mxu0 %v984
        %996 = vmatpush.bf16.msra.mxu0 %v983
        %997 = vmatpush.bf16.msra.mxu0 %v982
        %998 = vmatpush.bf16.msra.mxu0 %v981
        %999 = vmatpush.bf16.msra.mxu0 %v980
        %1000 = vmatpush.bf16.msra.mxu0 %v979
        %1001 = vmatpush.bf16.msra.mxu0 %v978
        %1002 = vmatmul.bf16.gmra.mxu0 %v927
        %v1003 = vpop.f32.mrf.mxu0
        %v1004 = vadd.f32 0.0, %v1003
        %v1005 = vpop.f32.mrf.mxu0
        %1006 = vdwg.mxu0
        %v1007 = vrot.slane %v1004, 4
        %v1008 = vadd.f32 %v1004, %v1007
        %v1009 = vrot.slane %v1008, 2
        %v1010 = vadd.f32 %v1008, %v1009
        %v1011 = vrot.slane %v1010, 1
        %v1012 = vadd.f32 %v1010, %v1011
        %v1013 = vmul.f32 %v1004, %v1004
        %v1014 = vrot.slane %v1013, 4
        %v1015 = vadd.f32 %v1013, %v1014
        %v1016 = vrot.slane %v1015, 2
        %v1017 = vadd.f32 %v1015, %v1016
        %v1018 = vrot.slane %v1017, 1
        %v1019 = vadd.f32 %v1017, %v1018
        %v1020 = vmul.f32 %v1012, 0.125
        %v1021 = vmul.f32 %v1019, 0.125
        %v1022 = vmul.f32 %v1020, %v1020
        %v1023 = vsub.f32 %v1021, %v1022
        %v1024 = vmax.f32 %v1023, 0.0
        %v1025 = vadd.f32 %v1024, 0.8
        %v1026 = vrsqrt.pop %v1025
        %v1027 = vmul.f32 %v1026, %v1025
        %v1028 = vmul.f32 %v1027, %v1026
        %v1029 = vmul.f32 0.5, %v1028
        %v1030 = vsub.f32 1.5, %v1029
        %v1031 = vmul.f32 %v1026, %v1030
        %vm1032 = vweird.f32 %v1025
        %vm1033 = vweird.f32 %v1026
        %vm1034 = vmor %vm1032, %vm1033
        %v1035 = vsel %vm1034, %v1026, %v1031
        %v1036 = vmul.f32 %v944, %v1035
        %v1037 = vmul.f32 %v1020, %v1036
        %v1038 = vsub.f32 %v945, %v1037
        %v1040 = vperm.slane %v1036, 0
        %v1042 = vmul.f32 %v1004, %v1040
        %v1044 = vperm.slane %v1038, 0
        %v1046 = vadd.f32 %v1042, %v1044
        %vm1047 = vcmp.gt.f32.partialorder %v1046, 0.0
        %v1048 = vmul.f32 %v1046, 0.2
        %v1049 = vsel %vm1047, %v1046, %v1048
        %v1050 = vpack.c.bf16 %v1049, %v1049
        %v1051 = vld [vmem:[#allocation10] sm:$0xf]
        %v1052 = vld [vmem:[#allocation10 + $0x4] sm:$0xf]
        %v1053 = vld [vmem:[#allocation10 + $0x8] sm:$0xf]
        %v1054 = vld [vmem:[#allocation10 + $0xc] sm:$0xf]
        %v1055 = vld [vmem:[#allocation10 + $0x10] sm:$0xf]
        %v1056 = vld [vmem:[#allocation10 + $0x14] sm:$0xf]
        %v1057 = vld [vmem:[#allocation10 + $0x18] sm:$0xf]
        %v1058 = vld [vmem:[#allocation10 + $0x1c] sm:$0xf]
        %v1059 = vld [vmem:[#allocation10 + $0x20] sm:$0xf]
        %v1060 = vld [vmem:[#allocation10 + $0x24] sm:$0xf]
        %v1061 = vld [vmem:[#allocation10 + $0x28] sm:$0xf]
        %v1062 = vld [vmem:[#allocation10 + $0x2c] sm:$0xf]
        %v1063 = vld [vmem:[#allocation10 + $0x30] sm:$0xf]
        %v1064 = vld [vmem:[#allocation10 + $0x34] sm:$0xf]
        %v1065 = vld [vmem:[#allocation10 + $0x38] sm:$0xf]
        %v1066 = vld [vmem:[#allocation10 + $0x3c] sm:$0xf]
        %v1067 = vld [vmem:[%s8] sm:$0x1]
        %v1068 = vld [vmem:[%s9] sm:$0x1]
        %v1085 = vunpack.c.l.b16 %v1051
        %v1086 = vunpack.c.l.b16 %v1052
        %v1087 = vunpack.c.l.b16 %v1053
        %v1088 = vunpack.c.l.b16 %v1054
        %v1089 = vunpack.c.l.b16 %v1055
        %v1090 = vunpack.c.l.b16 %v1056
        %v1091 = vunpack.c.l.b16 %v1057
        %v1092 = vunpack.c.l.b16 %v1058
        %v1093 = vunpack.c.l.b16 %v1059
        %v1094 = vunpack.c.l.b16 %v1060
        %v1095 = vunpack.c.l.b16 %v1061
        %v1096 = vunpack.c.l.b16 %v1062
        %v1097 = vunpack.c.l.b16 %v1063
        %v1098 = vunpack.c.l.b16 %v1064
        %v1099 = vunpack.c.l.b16 %v1065
        %v1100 = vunpack.c.l.b16 %v1066
        %v1101 = vpack.c.b16 %v1086, %v1085
        %v1102 = vpack.c.b16 %v1088, %v1087
        %v1103 = vpack.c.b16 %v1090, %v1089
        %v1104 = vpack.c.b16 %v1092, %v1091
        %v1105 = vpack.c.b16 %v1094, %v1093
        %v1106 = vpack.c.b16 %v1096, %v1095
        %v1107 = vpack.c.b16 %v1098, %v1097
        %v1108 = vpack.c.b16 %v1100, %v1099
        %1117 = vmatpush.bf16.msra.mxu0 %v1108
        %1118 = vmatpush.bf16.msra.mxu0 %v1107
        %1119 = vmatpush.bf16.msra.mxu0 %v1106
        %1120 = vmatpush.bf16.msra.mxu0 %v1105
        %1121 = vmatpush.bf16.msra.mxu0 %v1104
        %1122 = vmatpush.bf16.msra.mxu0 %v1103
        %1123 = vmatpush.bf16.msra.mxu0 %v1102
        %1124 = vmatpush.bf16.msra.mxu0 %v1101
        %1125 = vmatmul.bf16.gmra.mxu0 %v1050
        %v1126 = vpop.f32.mrf.mxu0
        %v1127 = vadd.f32 0.0, %v1126
        %v1128 = vpop.f32.mrf.mxu0
        %1129 = vdwg.mxu0
        %v1130 = vrot.slane %v1127, 4
        %v1131 = vadd.f32 %v1127, %v1130
        %v1132 = vrot.slane %v1131, 2
        %v1133 = vadd.f32 %v1131, %v1132
        %v1134 = vrot.slane %v1133, 1
        %v1135 = vadd.f32 %v1133, %v1134
        %v1136 = vmul.f32 %v1127, %v1127
        %v1137 = vrot.slane %v1136, 4
        %v1138 = vadd.f32 %v1136, %v1137
        %v1139 = vrot.slane %v1138, 2
        %v1140 = vadd.f32 %v1138, %v1139
        %v1141 = vrot.slane %v1140, 1
        %v1142 = vadd.f32 %v1140, %v1141
        %v1143 = vmul.f32 %v1135, 0.125
        %v1144 = vmul.f32 %v1142, 0.125
        %v1145 = vmul.f32 %v1143, %v1143
        %v1146 = vsub.f32 %v1144, %v1145
        %v1147 = vmax.f32 %v1146, 0.0
        %v1148 = vadd.f32 %v1147, 0.8
        %v1149 = vrsqrt.pop %v1148
        %v1150 = vmul.f32 %v1149, %v1148
        %v1151 = vmul.f32 %v1150, %v1149
        %v1152 = vmul.f32 0.5, %v1151
        %v1153 = vsub.f32 1.5, %v1152
        %v1154 = vmul.f32 %v1149, %v1153
        %vm1155 = vweird.f32 %v1148
        %vm1156 = vweird.f32 %v1149
        %vm1157 = vmor %vm1155, %vm1156
        %v1158 = vsel %vm1157, %v1149, %v1154
        %v1159 = vmul.f32 %v1067, %v1158
        %v1160 = vmul.f32 %v1143, %v1159
        %v1161 = vsub.f32 %v1068, %v1160
        %v1163 = vperm.slane %v1159, 0
        %v1165 = vmul.f32 %v1127, %v1163
        %v1167 = vperm.slane %v1161, 0
        %v1169 = vadd.f32 %v1165, %v1167
        %vm1170 = vcmp.gt.f32.partialorder %v1169, 0.0
        %v1171 = vmul.f32 %v1169, 0.2
        %v1172 = vsel %vm1170, %v1169, %v1171
        %v1173 = vpack.c.bf16 %v1172, %v1172
        %v1174 = vld [vmem:[#allocation11] sm:$0xf]
        %v1175 = vld [vmem:[#allocation11 + $0x4] sm:$0xf]
        %v1176 = vld [vmem:[#allocation11 + $0x8] sm:$0xf]
        %v1177 = vld [vmem:[#allocation11 + $0xc] sm:$0xf]
        %v1178 = vld [vmem:[#allocation11 + $0x10] sm:$0xf]
        %v1179 = vld [vmem:[#allocation11 + $0x14] sm:$0xf]
        %v1180 = vld [vmem:[#allocation11 + $0x18] sm:$0xf]
        %v1181 = vld [vmem:[#allocation11 + $0x1c] sm:$0xf]
        %v1182 = vld [vmem:[#allocation11 + $0x20] sm:$0xf]
        %v1183 = vld [vmem:[#allocation11 + $0x24] sm:$0xf]
        %v1184 = vld [vmem:[#allocation11 + $0x28] sm:$0xf]
        %v1185 = vld [vmem:[#allocation11 + $0x2c] sm:$0xf]
        %v1186 = vld [vmem:[#allocation11 + $0x30] sm:$0xf]
        %v1187 = vld [vmem:[#allocation11 + $0x34] sm:$0xf]
        %v1188 = vld [vmem:[#allocation11 + $0x38] sm:$0xf]
        %v1189 = vld [vmem:[#allocation11 + $0x3c] sm:$0xf]
        %v1190 = vld [vmem:[%s11] sm:$0x1]
        %v1191 = vld [vmem:[%s12] sm:$0x1]
        %v1208 = vunpack.c.l.b16 %v1174
        %v1209 = vunpack.c.l.b16 %v1175
        %v1210 = vunpack.c.l.b16 %v1176
        %v1211 = vunpack.c.l.b16 %v1177
        %v1212 = vunpack.c.l.b16 %v1178
        %v1213 = vunpack.c.l.b16 %v1179
        %v1214 = vunpack.c.l.b16 %v1180
        %v1215 = vunpack.c.l.b16 %v1181
        %v1216 = vunpack.c.l.b16 %v1182
        %v1217 = vunpack.c.l.b16 %v1183
        %v1218 = vunpack.c.l.b16 %v1184
        %v1219 = vunpack.c.l.b16 %v1185
        %v1220 = vunpack.c.l.b16 %v1186
        %v1221 = vunpack.c.l.b16 %v1187
        %v1222 = vunpack.c.l.b16 %v1188
        %v1223 = vunpack.c.l.b16 %v1189
        %v1224 = vpack.c.b16 %v1209, %v1208
        %v1225 = vpack.c.b16 %v1211, %v1210
        %v1226 = vpack.c.b16 %v1213, %v1212
        %v1227 = vpack.c.b16 %v1215, %v1214
        %v1228 = vpack.c.b16 %v1217, %v1216
        %v1229 = vpack.c.b16 %v1219, %v1218
        %v1230 = vpack.c.b16 %v1221, %v1220
        %v1231 = vpack.c.b16 %v1223, %v1222
        %1240 = vmatpush.bf16.msra.mxu0 %v1231
        %1241 = vmatpush.bf16.msra.mxu0 %v1230
        %1242 = vmatpush.bf16.msra.mxu0 %v1229
        %1243 = vmatpush.bf16.msra.mxu0 %v1228
        %1244 = vmatpush.bf16.msra.mxu0 %v1227
        %1245 = vmatpush.bf16.msra.mxu0 %v1226
        %1246 = vmatpush.bf16.msra.mxu0 %v1225
        %1247 = vmatpush.bf16.msra.mxu0 %v1224
        %1248 = vmatmul.bf16.gmra.mxu0 %v1173
        %v1249 = vpop.f32.mrf.mxu0
        %v1250 = vadd.f32 0.0, %v1249
        %v1251 = vpop.f32.mrf.mxu0
        %1252 = vdwg.mxu0
        %v1253 = vrot.slane %v1250, 4
        %v1254 = vadd.f32 %v1250, %v1253
        %v1255 = vrot.slane %v1254, 2
        %v1256 = vadd.f32 %v1254, %v1255
        %v1257 = vrot.slane %v1256, 1
        %v1258 = vadd.f32 %v1256, %v1257
        %v1259 = vmul.f32 %v1250, %v1250
        %v1260 = vrot.slane %v1259, 4
        %v1261 = vadd.f32 %v1259, %v1260
        %v1262 = vrot.slane %v1261, 2
        %v1263 = vadd.f32 %v1261, %v1262
        %v1264 = vrot.slane %v1263, 1
        %v1265 = vadd.f32 %v1263, %v1264
        %v1266 = vmul.f32 %v1258, 0.125
        %v1267 = vmul.f32 %v1265, 0.125
        %v1268 = vmul.f32 %v1266, %v1266
        %v1269 = vsub.f32 %v1267, %v1268
        %v1270 = vmax.f32 %v1269, 0.0
        %v1271 = vadd.f32 %v1270, 0.8
        %v1272 = vrsqrt.pop %v1271
        %v1273 = vmul.f32 %v1272, %v1271
        %v1274 = vmul.f32 %v1273, %v1272
        %v1275 = vmul.f32 0.5, %v1274
        %v1276 = vsub.f32 1.5, %v1275
        %v1277 = vmul.f32 %v1272, %v1276
        %vm1278 = vweird.f32 %v1271
        %vm1279 = vweird.f32 %v1272
        %vm1280 = vmor %vm1278, %vm1279
        %v1281 = vsel %vm1280, %v1272, %v1277
        %v1282 = vmul.f32 %v1190, %v1281
        %v1283 = vmul.f32 %v1266, %v1282
        %v1284 = vsub.f32 %v1191, %v1283
        %v1286 = vperm.slane %v1282, 0
        %v1288 = vmul.f32 %v1250, %v1286
        %v1290 = vperm.slane %v1284, 0
        %v1292 = vadd.f32 %v1288, %v1290
        %vm1293 = vcmp.gt.f32.partialorder %v1292, 0.0
        %v1294 = vmul.f32 %v1292, 0.2
        %v1295 = vsel %vm1293, %v1292, %v1294
        %v1296 = vpack.c.bf16 %v1295, %v1295
        %v1297 = vld [vmem:[#allocation13] sm:$0xf]
        %v1298 = vld [vmem:[#allocation13 + $0x4] sm:$0xf]
        %v1299 = vld [vmem:[#allocation13 + $0x8] sm:$0xf]
        %v1300 = vld [vmem:[#allocation13 + $0xc] sm:$0xf]
        %v1301 = vld [vmem:[#allocation13 + $0x10] sm:$0xf]
        %v1302 = vld [vmem:[#allocation13 + $0x14] sm:$0xf]
        %v1303 = vld [vmem:[#allocation13 + $0x18] sm:$0xf]
        %v1304 = vld [vmem:[#allocation13 + $0x1c] sm:$0xf]
        %v1305 = vld [vmem:[#allocation13 + $0x20] sm:$0xf]
        %v1306 = vld [vmem:[#allocation13 + $0x24] sm:$0xf]
        %v1307 = vld [vmem:[#allocation13 + $0x28] sm:$0xf]
        %v1308 = vld [vmem:[#allocation13 + $0x2c] sm:$0xf]
        %v1309 = vld [vmem:[#allocation13 + $0x30] sm:$0xf]
        %v1310 = vld [vmem:[#allocation13 + $0x34] sm:$0xf]
        %v1311 = vld [vmem:[#allocation13 + $0x38] sm:$0xf]
        %v1312 = vld [vmem:[#allocation13 + $0x3c] sm:$0xf]
        %v1313 = vld [vmem:[%s14] sm:$0x1]
        %v1314 = vld [vmem:[%s15] sm:$0x1]
        %v1331 = vunpack.c.l.b16 %v1297
        %v1332 = vunpack.c.l.b16 %v1298
        %v1333 = vunpack.c.l.b16 %v1299
        %v1334 = vunpack.c.l.b16 %v1300
        %v1335 = vunpack.c.l.b16 %v1301
        %v1336 = vunpack.c.l.b16 %v1302
        %v1337 = vunpack.c.l.b16 %v1303
        %v1338 = vunpack.c.l.b16 %v1304
        %v1339 = vunpack.c.l.b16 %v1305
        %v1340 = vunpack.c.l.b16 %v1306
        %v1341 = vunpack.c.l.b16 %v1307
        %v1342 = vunpack.c.l.b16 %v1308
        %v1343 = vunpack.c.l.b16 %v1309
        %v1344 = vunpack.c.l.b16 %v1310
        %v1345 = vunpack.c.l.b16 %v1311
        %v1346 = vunpack.c.l.b16 %v1312
        %v1347 = vpack.c.b16 %v1332, %v1331
        %v1348 = vpack.c.b16 %v1334, %v1333
        %v1349 = vpack.c.b16 %v1336, %v1335
        %v1350 = vpack.c.b16 %v1338, %v1337
        %v1351 = vpack.c.b16 %v1340, %v1339
        %v1352 = vpack.c.b16 %v1342, %v1341
        %v1353 = vpack.c.b16 %v1344, %v1343
        %v1354 = vpack.c.b16 %v1346, %v1345
        %1363 = vmatpush.bf16.msra.mxu0 %v1354
        %1364 = vmatpush.bf16.msra.mxu0 %v1353
        %1365 = vmatpush.bf16.msra.mxu0 %v1352
        %1366 = vmatpush.bf16.msra.mxu0 %v1351
        %1367 = vmatpush.bf16.msra.mxu0 %v1350
        %1368 = vmatpush.bf16.msra.mxu0 %v1349
        %1369 = vmatpush.bf16.msra.mxu0 %v1348
        %1370 = vmatpush.bf16.msra.mxu0 %v1347
        %1371 = vmatmul.bf16.gmra.mxu0 %v1296
        %v1372 = vpop.f32.mrf.mxu0
        %v1373 = vadd.f32 0.0, %v1372
        %v1374 = vpop.f32.mrf.mxu0
        %1375 = vdwg.mxu0
        %v1376 = vrot.slane %v1373, 4
        %v1377 = vadd.f32 %v1373, %v1376
        %v1378 = vrot.slane %v1377, 2
        %v1379 = vadd.f32 %v1377, %v1378
        %v1380 = vrot.slane %v1379, 1
        %v1381 = vadd.f32 %v1379, %v1380
        %v1382 = vmul.f32 %v1373, %v1373
        %v1383 = vrot.slane %v1382, 4
        %v1384 = vadd.f32 %v1382, %v1383
        %v1385 = vrot.slane %v1384, 2
        %v1386 = vadd.f32 %v1384, %v1385
        %v1387 = vrot.slane %v1386, 1
        %v1388 = vadd.f32 %v1386, %v1387
        %v1389 = vmul.f32 %v1381, 0.125
        %v1390 = vmul.f32 %v1388, 0.125
        %v1391 = vmul.f32 %v1389, %v1389
        %v1392 = vsub.f32 %v1390, %v1391
        %v1393 = vmax.f32 %v1392, 0.0
        %v1394 = vadd.f32 %v1393, 0.8
        %v1395 = vrsqrt.pop %v1394
        %v1396 = vmul.f32 %v1395, %v1394
        %v1397 = vmul.f32 %v1396, %v1395
        %v1398 = vmul.f32 0.5, %v1397
        %v1399 = vsub.f32 1.5, %v1398
        %v1400 = vmul.f32 %v1395, %v1399
        %vm1401 = vweird.f32 %v1394
        %vm1402 = vweird.f32 %v1395
        %vm1403 = vmor %vm1401, %vm1402
        %v1404 = vsel %vm1403, %v1395, %v1400
        %v1405 = vmul.f32 %v1313, %v1404
        %v1406 = vmul.f32 %v1389, %v1405
        %v1407 = vsub.f32 %v1314, %v1406
        %v1409 = vperm.slane %v1405, 0
        %v1411 = vmul.f32 %v1373, %v1409
        %v1413 = vperm.slane %v1407, 0
        %v1415 = vadd.f32 %v1411, %v1413
        %vm1416 = vcmp.gt.f32.partialorder %v1415, 0.0
        %v1417 = vmul.f32 %v1415, 0.2
        %v1418 = vsel %vm1416, %v1415, %v1417
        %v1419 = vpack.c.bf16 %v1418, %v1418
        %v1420 = vld [vmem:[#allocation14] sm:$0xf]
        %v1421 = vld [vmem:[#allocation14 + $0x4] sm:$0xf]
        %v1422 = vld [vmem:[#allocation14 + $0x8] sm:$0xf]
        %v1423 = vld [vmem:[#allocation14 + $0xc] sm:$0xf]
        %v1424 = vld [vmem:[#allocation14 + $0x10] sm:$0xf]
        %v1425 = vld [vmem:[#allocation14 + $0x14] sm:$0xf]
        %v1426 = vld [vmem:[#allocation14 + $0x18] sm:$0xf]
        %v1427 = vld [vmem:[#allocation14 + $0x1c] sm:$0xf]
        %v1428 = vld [vmem:[#allocation14 + $0x20] sm:$0xf]
        %v1429 = vld [vmem:[#allocation14 + $0x24] sm:$0xf]
        %v1430 = vld [vmem:[#allocation14 + $0x28] sm:$0xf]
        %v1431 = vld [vmem:[#allocation14 + $0x2c] sm:$0xf]
        %v1432 = vld [vmem:[#allocation14 + $0x30] sm:$0xf]
        %v1433 = vld [vmem:[#allocation14 + $0x34] sm:$0xf]
        %v1434 = vld [vmem:[#allocation14 + $0x38] sm:$0xf]
        %v1435 = vld [vmem:[#allocation14 + $0x3c] sm:$0xf]
        %v1436 = vld [vmem:[%s17] sm:$0x1]
        %v1437 = vld [vmem:[%s18] sm:$0x1]
        %v1454 = vunpack.c.l.b16 %v1420
        %v1455 = vunpack.c.l.b16 %v1421
        %v1456 = vunpack.c.l.b16 %v1422
        %v1457 = vunpack.c.l.b16 %v1423
        %v1458 = vunpack.c.l.b16 %v1424
        %v1459 = vunpack.c.l.b16 %v1425
        %v1460 = vunpack.c.l.b16 %v1426
        %v1461 = vunpack.c.l.b16 %v1427
        %v1462 = vunpack.c.l.b16 %v1428
        %v1463 = vunpack.c.l.b16 %v1429
        %v1464 = vunpack.c.l.b16 %v1430
        %v1465 = vunpack.c.l.b16 %v1431
        %v1466 = vunpack.c.l.b16 %v1432
        %v1467 = vunpack.c.l.b16 %v1433
        %v1468 = vunpack.c.l.b16 %v1434
        %v1469 = vunpack.c.l.b16 %v1435
        %v1470 = vpack.c.b16 %v1455, %v1454
        %v1471 = vpack.c.b16 %v1457, %v1456
        %v1472 = vpack.c.b16 %v1459, %v1458
        %v1473 = vpack.c.b16 %v1461, %v1460
        %v1474 = vpack.c.b16 %v1463, %v1462
        %v1475 = vpack.c.b16 %v1465, %v1464
        %v1476 = vpack.c.b16 %v1467, %v1466
        %v1477 = vpack.c.b16 %v1469, %v1468
        %1486 = vmatpush.bf16.msra.mxu0 %v1477
        %1487 = vmatpush.bf16.msra.mxu0 %v1476
        %1488 = vmatpush.bf16.msra.mxu0 %v1475
        %1489 = vmatpush.bf16.msra.mxu0 %v1474
        %1490 = vmatpush.bf16.msra.mxu0 %v1473
        %1491 = vmatpush.bf16.msra.mxu0 %v1472
        %1492 = vmatpush.bf16.msra.mxu0 %v1471
        %1493 = vmatpush.bf16.msra.mxu0 %v1470
        %1494 = vmatmul.bf16.gmra.mxu0 %v1419
        %v1495 = vpop.f32.mrf.mxu0
        %v1496 = vadd.f32 0.0, %v1495
        %v1497 = vpop.f32.mrf.mxu0
        %1498 = vdwg.mxu0
        %v1499 = vrot.slane %v1496, 4
        %v1500 = vadd.f32 %v1496, %v1499
        %v1501 = vrot.slane %v1500, 2
        %v1502 = vadd.f32 %v1500, %v1501
        %v1503 = vrot.slane %v1502, 1
        %v1504 = vadd.f32 %v1502, %v1503
        %v1505 = vmul.f32 %v1496, %v1496
        %v1506 = vrot.slane %v1505, 4
        %v1507 = vadd.f32 %v1505, %v1506
        %v1508 = vrot.slane %v1507, 2
        %v1509 = vadd.f32 %v1507, %v1508
        %v1510 = vrot.slane %v1509, 1
        %v1511 = vadd.f32 %v1509, %v1510
        %v1512 = vmul.f32 %v1504, 0.125
        %v1513 = vmul.f32 %v1511, 0.125
        %v1514 = vmul.f32 %v1512, %v1512
        %v1515 = vsub.f32 %v1513, %v1514
        %v1516 = vmax.f32 %v1515, 0.0
        %v1517 = vadd.f32 %v1516, 0.8
        %v1518 = vrsqrt.pop %v1517
        %v1519 = vmul.f32 %v1518, %v1517
        %v1520 = vmul.f32 %v1519, %v1518
        %v1521 = vmul.f32 0.5, %v1520
        %v1522 = vsub.f32 1.5, %v1521
        %v1523 = vmul.f32 %v1518, %v1522
        %vm1524 = vweird.f32 %v1517
        %vm1525 = vweird.f32 %v1518
        %vm1526 = vmor %vm1524, %vm1525
        %v1527 = vsel %vm1526, %v1518, %v1523
        %v1528 = vmul.f32 %v1436, %v1527
        %v1529 = vmul.f32 %v1512, %v1528
        %v1530 = vsub.f32 %v1437, %v1529
        %v1532 = vperm.slane %v1528, 0
        %v1534 = vmul.f32 %v1496, %v1532
        %v1536 = vperm.slane %v1530, 0
        %v1538 = vadd.f32 %v1534, %v1536
        %vm1539 = vcmp.gt.f32.partialorder %v1538, 0.0
        %v1540 = vmul.f32 %v1538, 0.2
        %v1541 = vsel %vm1539, %v1538, %v1540
        %v1542 = vpack.c.bf16 %v1541, %v1541
        %v1543 = vld [vmem:[#allocation16] sm:$0xff]
        %v1544 = vld [vmem:[#allocation16 + $0x8] sm:$0xff]
        %v1545 = vld [vmem:[#allocation16 + $0x10] sm:$0xff]
        %v1546 = vld [vmem:[#allocation16 + $0x18] sm:$0xff]
        %v1547 = vld [vmem:[#allocation16 + $0x20] sm:$0xff]
        %v1548 = vld [vmem:[#allocation16 + $0x28] sm:$0xff]
        %v1549 = vld [vmem:[#allocation16 + $0x30] sm:$0xff]
        %v1550 = vld [vmem:[#allocation16 + $0x38] sm:$0xff]
        %v1551 = vld [vmem:[#allocation16 + $0x40] sm:$0xff]
        %v1552 = vld [vmem:[#allocation16 + $0x48] sm:$0xff]
        %v1553 = vld [vmem:[#allocation16 + $0x50] sm:$0xff]
        %v1554 = vld [vmem:[#allocation16 + $0x58] sm:$0xff]
        %v1555 = vld [vmem:[#allocation16 + $0x60] sm:$0xff]
        %v1556 = vld [vmem:[#allocation16 + $0x68] sm:$0xff]
        %v1557 = vld [vmem:[#allocation16 + $0x70] sm:$0xff]
        %v1558 = vld [vmem:[#allocation16 + $0x78] sm:$0xff]
        %v1559 = vld [vmem:[%s20] sm:$0x3]
        %v1561 = vperm.slane %v1559, 0
        %v1562 = vperm.slane %v1559, 1
        %v1581 = vunpack.c.l.b16 %v1543
        %v1582 = vunpack.c.h.b16 %v1543
        %v1583 = vunpack.c.l.b16 %v1544
        %v1584 = vunpack.c.h.b16 %v1544
        %v1585 = vunpack.c.l.b16 %v1545
        %v1586 = vunpack.c.h.b16 %v1545
        %v1587 = vunpack.c.l.b16 %v1546
        %v1588 = vunpack.c.h.b16 %v1546
        %v1589 = vunpack.c.l.b16 %v1547
        %v1590 = vunpack.c.h.b16 %v1547
        %v1591 = vunpack.c.l.b16 %v1548
        %v1592 = vunpack.c.h.b16 %v1548
        %v1593 = vunpack.c.l.b16 %v1549
        %v1594 = vunpack.c.h.b16 %v1549
        %v1595 = vunpack.c.l.b16 %v1550
        %v1596 = vunpack.c.h.b16 %v1550
        %v1597 = vunpack.c.l.b16 %v1551
        %v1598 = vunpack.c.h.b16 %v1551
        %v1599 = vunpack.c.l.b16 %v1552
        %v1600 = vunpack.c.h.b16 %v1552
        %v1601 = vunpack.c.l.b16 %v1553
        %v1602 = vunpack.c.h.b16 %v1553
        %v1603 = vunpack.c.l.b16 %v1554
        %v1604 = vunpack.c.h.b16 %v1554
        %v1605 = vunpack.c.l.b16 %v1555
        %v1606 = vunpack.c.h.b16 %v1555
        %v1607 = vunpack.c.l.b16 %v1556
        %v1608 = vunpack.c.h.b16 %v1556
        %v1609 = vunpack.c.l.b16 %v1557
        %v1610 = vunpack.c.h.b16 %v1557
        %v1611 = vunpack.c.l.b16 %v1558
        %v1612 = vunpack.c.h.b16 %v1558
        %v1613 = vpack.c.b16 %v1583, %v1581
        %v1614 = vpack.c.b16 %v1584, %v1582
        %v1615 = vpack.c.b16 %v1587, %v1585
        %v1616 = vpack.c.b16 %v1588, %v1586
        %v1617 = vpack.c.b16 %v1591, %v1589
        %v1618 = vpack.c.b16 %v1592, %v1590
        %v1619 = vpack.c.b16 %v1595, %v1593
        %v1620 = vpack.c.b16 %v1596, %v1594
        %v1621 = vpack.c.b16 %v1599, %v1597
        %v1622 = vpack.c.b16 %v1600, %v1598
        %v1623 = vpack.c.b16 %v1603, %v1601
        %v1624 = vpack.c.b16 %v1604, %v1602
        %v1625 = vpack.c.b16 %v1607, %v1605
        %v1626 = vpack.c.b16 %v1608, %v1606
        %v1627 = vpack.c.b16 %v1611, %v1609
        %v1628 = vpack.c.b16 %v1612, %v1610
        %1645 = vmatpush.bf16.msra.mxu0 %v1627
        %1646 = vmatpush.bf16.msra.mxu0 %v1625
        %1647 = vmatpush.bf16.msra.mxu0 %v1623
        %1648 = vmatpush.bf16.msra.mxu0 %v1621
        %1649 = vmatpush.bf16.msra.mxu0 %v1619
        %1650 = vmatpush.bf16.msra.mxu0 %v1617
        %1651 = vmatpush.bf16.msra.mxu0 %v1615
        %1652 = vmatpush.bf16.msra.mxu0 %v1613
        %1653 = vmatmul.bf16.gmra.mxu0 %v1542
        %v1654 = vpop.f32.mrf.mxu0
        %v1655 = vadd.f32 %v1561, %v1654
        %v1656 = vpop.f32.mrf.mxu0
        %1657 = vdwg.mxu0
        %1658 = vmatpush.bf16.msra.mxu0 %v1628
        %1659 = vmatpush.bf16.msra.mxu0 %v1626
        %1660 = vmatpush.bf16.msra.mxu0 %v1624
        %1661 = vmatpush.bf16.msra.mxu0 %v1622
        %1662 = vmatpush.bf16.msra.mxu0 %v1620
        %1663 = vmatpush.bf16.msra.mxu0 %v1618
        %1664 = vmatpush.bf16.msra.mxu0 %v1616
        %1665 = vmatpush.bf16.msra.mxu0 %v1614
        %1666 = vmatmul.bf16.gmra.mxu0 %v1542
        %v1667 = vpop.f32.mrf.mxu0
        %v1668 = vadd.f32 %v1562, %v1667
        %v1669 = vpop.f32.mrf.mxu0
        %1670 = vdwg.mxu0
        %v1671 = vtanh.pop %v1655
        %v1672 = vtanh.pop %v1668
        %1673 = vst [vmem:[%s803] sm:$0xff] %v1671
        %1674 = vst [vmem:[%s803 + $0x8] sm:$0xff] %v1672
        %s1675 = sand.u32 %s496, 1
        %s1676 = scalar_lea.sflag [#allocation4], %s1675
        %s1677 = sand.u32 %s496, 1
        %s1678 = smul.addr %s1677, 16
        %s1679 = scalar_lea.vmem [#allocation17], %s1678
        // Predicated region
        $region141: #{tpu_custom_call.1} parent=103 // pred_check
          %p1680 = pneg %p506
        $region142: #{tpu_custom_call.1} parent=103 // pred_check_branch
          %1682 = sbr.rel (%p1680) target = $region144
        $region143: #{tpu_custom_call.1} parent=103 // pred_region
          %1684 = vsyncadd %s1676, 0
          %s1685 = smul.addr %s42, 2
          %s1686 = smul.addr %s1685, 8
          %s1687 = scalar_lea.hbm %s21, %s1686
          %s1689 = sshll.u32 %s1679, 4
          %s1690 = int_to_ptr.vmem [resolvable:$true] %s1689
          %s1691 = sshll.u32 %s1687, 4
          %s1692 = int_to_ptr.hbm [resolvable:$true] %s1691
          %1694 = dma.vmem_to_hbm [thread:$0]  %s1690, 256, %s1692, %s1676
        $region144: #{tpu_custom_call.1} parent=103 // pred_fallthru
          _
      $region104: #{tpu_custom_call.1} parent=5 // pred_fallthru
        _
      %p1695 = scmp.le.s32.totalorder 2, %s37
      // Predicated region
      $region145: #{tpu_custom_call.1} parent=5 // pred_check
        %p1696 = pneg %p1695
      $region146: #{tpu_custom_call.1} parent=5 // pred_check_branch
        %1698 = sbr.rel (%p1696) target = $region148
      $region147: #{tpu_custom_call.1} parent=5 // pred_region
        %s1699 = ssub.s32 %s37, 2
        // Predicated region
        $region149: #{tpu_custom_call.1} parent=147 // pred_check
          %p1700 = pneg %p512
        $region150: #{tpu_custom_call.1} parent=147 // pred_check_branch
          %1702 = sbr.rel (%p1700) target = $region152
        $region151: #{tpu_custom_call.1} parent=147 // pred_region
          %s1703 = sand.u32 %s497, 1
          %s1704 = scalar_lea.sflag [#allocation4], %s1703
          %s1705 = sand.u32 %s497, 1
          %s1706 = smul.addr %s1705, 16
          %s1707 = scalar_lea.vmem [#allocation17], %s1706
          %1709 = dma.done %s1704, 256
        $region152: #{tpu_custom_call.1} parent=147 // pred_fallthru
          _
      $region148: #{tpu_custom_call.1} parent=5 // pred_fallthru
        _
    $region6: #{tpu_custom_call.1} parent=1 // loop_footer
      %s41 = sadd.s32 1, %s37
    $region7: #{tpu_custom_call.1} parent=1 // loop_footer_branch
      %36 = sbr.rel target = $region3
    $region8: #{tpu_custom_call.1} parent=1 // loop_exit
      _
    %1710 = vsyncpa [#allocation3], 1
    %s1711 = scalar_lea.sflag [#allocation3], 1
    %1712 = vsyncpa %s1711, 1
    %1713 = vsyncpa [#allocation6], 1
    %1714 = vsyncpa [#allocation9], 1
    %1715 = vsyncpa [#allocation12], 1
    %1716 = vsyncpa [#allocation15], 1
    %1717 = vsyncpa [#allocation4], 1
    %s1718 = scalar_lea.sflag [#allocation4], 1
    %1719 = vsyncpa %s1718, 1

</llo_original>
